<compile_context>
chip_gen: v7x
topology: tpu7x:2x2x1
jax: 0.10.0
libtpu: 0.0.40
codegen_flags: <defaults>
</compile_context>

<pallas_src>
import functools

import jax
import jax.numpy as jnp
from jax.experimental import pallas as pl
from jax.experimental.pallas import tpu as pltpu

STATE_SIZE = 32
HIDDEN = 256           # LSTM hidden size
FEAT1 = 512            # first Linear of feature_net
FEAT2 = 256            # second Linear of feature_net
LN_EPS = 1e-5
GATE_W = 3 * HIDDEN    # pruned gate width [i, g, o]
MAX_BATCH_TILE = 512   # rows per grid step (f32-sublane aligned, VMEM-safe on all generations)
_TILE_CANDIDATES = (8, 16, 32, 64, 128, 256, 512)


def _round_up(n, m):
    return ((n + m - 1) // m) * m


def _choose_batch_tile(b8, max_tile):
    """Pick a batch tile (multiple of 8) minimizing dead rows + per-step overhead.

    Prefers grid >= 2 whenever there is more than one 8-row group so that on v7x (2 TCs/chip,
    dimension_semantics=("parallel",)) the second TensorCore gets half the batch."""
    want_split = b8 > 8
    best_t, best_key = None, None
    for t in _TILE_CANDIDATES:
        if t > max_tile:
            break
        grid = -(-b8 // t)
        pad = grid * t - b8
        # ~0.35us per grid step ~= a few tens of rows of EUP/VALU work; weight steps at ~32 rows.
        cost = pad + 32 * grid
        key = (0 if (grid >= 2 or not want_split) else 1, cost, grid)
        if best_key is None or key < best_key:
            best_t, best_key = t, key
    return best_t


def _tanh(z, bf16_eup):
    # On v6e/v7x the EUP runs bf16 at ~2x f32 throughput; surrounding adds/muls stay f32.
    if bf16_eup:
        return jnp.tanh(z.astype(jnp.bfloat16)).astype(jnp.float32)
    return jnp.tanh(z)


def _lstm_gates_zero_state(gates, bf16_eup):
    """Elementwise LSTM cell math with h_prev = c_prev = 0.

    `gates` is (B, 3H) f32 in pruned gate order [i, g, o]; the i/o columns (weights AND fused
    biases) were pre-scaled by 0.5 at pack time, so sigmoid(z) == 0.5*tanh(gates) + 0.5 here."""
    i = 0.5 * _tanh(gates[:, 0 * HIDDEN:1 * HIDDEN], bf16_eup) + 0.5
    g = _tanh(gates[:, 1 * HIDDEN:2 * HIDDEN], bf16_eup)
    o = 0.5 * _tanh(gates[:, 2 * HIDDEN:3 * HIDDEN], bf16_eup) + 0.5
    c = i * g                       # f * c_prev + i * g, with c_prev == 0
    return o * _tanh(c, bf16_eup)


def _layernorm(y, gamma, beta, n):
    # Single pass: sum and sum-of-squares together; var = E[y^2] - mean^2 (clamped at 0).
    # NOTE: less robust than two-pass if |mean| >> std; fine at these magnitudes / tolerance.
    inv_n = 1.0 / float(n)
    s = jnp.sum(y, axis=-1, keepdims=True)
    ss = jnp.sum(y * y, axis=-1, keepdims=True)
    mean = s * inv_n
    var = jnp.maximum(ss * inv_n - mean * mean, 0.0)
    return (y - mean) * jax.lax.rsqrt(var + LN_EPS) * gamma + beta


def shared_feature_kernel(x_ref, wih0_ref, wih1_ref, w1_ref, w2_ref, vec_ref, out_ref, *, bf16_eup):
    # f32 vector slab rows: 0 b0, 1 b1, 2 fc1_b, 3 ln1_g, 4 ln1_b, 5 fc2_b, 6 ln2_g, 7 ln2_b
    b0 = vec_ref[0:1, :]
    b1 = vec_ref[1:2, :]
    bm1 = vec_ref[2:3, 0:FEAT1]
    g1 = vec_ref[3:4, 0:FEAT1]
    be1 = vec_ref[4:5, 0:FEAT1]
    bm2 = vec_ref[5:6, 0:FEAT2]
    g2 = vec_ref[6:7, 0:FEAT2]
    be2 = vec_ref[7:8, 0:FEAT2]

    x = x_ref[...].astype(jnp.bfloat16)

    # ---- LSTM layer 0 / layer 1 (zero initial state) ----
    gates0 = jnp.dot(x, wih0_ref[...], preferred_element_type=jnp.float32) + b0
    h0 = _lstm_gates_zero_state(gates0, bf16_eup)
    gates1 = jnp.dot(h0.astype(jnp.bfloat16), wih1_ref[...],
                     preferred_element_type=jnp.float32) + b1
    h1 = _lstm_gates_zero_state(gates1, bf16_eup)

    # ---- feature_net: Linear(256,512) -> LayerNorm -> ReLU -> Linear(512,256) -> LayerNorm -> ReLU
    y = jnp.dot(h1.astype(jnp.bfloat16), w1_ref[...], preferred_element_type=jnp.float32) + bm1
    y = jnp.maximum(_layernorm(y, g1, be1, FEAT1), 0.0)

    y = jnp.dot(y.astype(jnp.bfloat16), w2_ref[...], preferred_element_type=jnp.float32) + bm2
    y = jnp.maximum(_layernorm(y, g2, be2, FEAT2), 0.0)

    out_ref[...] = y.astype(out_ref.dtype)


def _bf16_eup_supported():
    """bf16 transcendentals only on v6e / v7x (v5e and older have no bf16 EUP)."""
    try:
        kind = jax.devices()[0].device_kind.lower()
    except Exception:
        return False
    return any(tag in kind for tag in ("v6", "v7", "6e", "7x"))


def shared_feature_extractor(x, kp, *, batch_tile=MAX_BATCH_TILE, bf16_eup=None):
    """x: (B, state_size) float32, kp: packed kernel params.  Returns (B, 256) float32."""
    B, S = x.shape
    if bf16_eup is None:
        bf16_eup = _bf16_eup_supported()

    b8 = _round_up(B, 8)
    tb = _choose_batch_tile(b8, batch_tile)
    grid_n = -(-b8 // tb)
    b_pad = grid_n * tb
    if b_pad != B:
        x = jnp.pad(x, ((0, b_pad - B), (0, 0)))

    weights = (kp["wih0"], kp["wih1"], kp["w1"], kp["w2"], kp["vec"])
    # Full-array blocks with a constant index_map -> VMEM-resident, DMA'd once across the grid.
    weight_specs = [pl.BlockSpec(w.shape, lambda i: (0, 0)) for w in weights]

    weight_bytes = sum(int(w.size) * w.dtype.itemsize for w in weights)
    flops = 2 * b_pad * (S * GATE_W + HIDDEN * GATE_W + HIDDEN * FEAT1 + FEAT1 * FEAT2)
    transcendentals = b_pad * (8 * HIDDEN + 2)   # 4 tanh-class ops * 2H per LSTM layer + 2 rsqrt
    bytes_accessed = weight_bytes + b_pad * S * 4 + b_pad * FEAT2 * 4

    out = pl.pallas_call(
        functools.partial(shared_feature_kernel, bf16_eup=bf16_eup),
        out_shape=jax.ShapeDtypeStruct((b_pad, FEAT2), jnp.float32),
        grid=(grid_n,),
        in_specs=[pl.BlockSpec((tb, S), lambda i: (i, 0))] + weight_specs,
        out_specs=pl.BlockSpec((tb, FEAT2), lambda i: (i, 0)),
        compiler_params=pltpu.CompilerParams(dimension_semantics=("parallel",)),
        cost_estimate=pl.CostEstimate(
            flops=flops, transcendentals=transcendentals, bytes_accessed=bytes_accessed),
    )(x, *weights)
    return out[:B]


def init_params(key, state_size):
    """Deterministic synthetic parameters in the PyTorch module's native layout."""
    ks = jax.random.split(key, 12)
    scale = 0.05

    def w(k, shape):
        return jax.random.normal(k, shape, jnp.float32) * scale

    return {
        "weight_ih_l0": w(ks[0], (4 * HIDDEN, state_size)),
        "bias_ih_l0": w(ks[1], (4 * HIDDEN,)),
        "bias_hh_l0": w(ks[2], (4 * HIDDEN,)),
        "weight_ih_l1": w(ks[3], (4 * HIDDEN, HIDDEN)),
        "bias_ih_l1": w(ks[4], (4 * HIDDEN,)),
        "bias_hh_l1": w(ks[5], (4 * HIDDEN,)),
        # NOTE: weight_hh_l0 / weight_hh_l1 exist in the module but multiply the zero initial
        # hidden state (self.hidden is None), so they are mathematically irrelevant here.
        "fc1_w": w(ks[6], (FEAT1, HIDDEN)),
        "fc1_b": w(ks[7], (FEAT1,)),
        "ln1_g": jnp.ones((FEAT1,), jnp.float32),
        "ln1_b": jnp.zeros((FEAT1,), jnp.float32),
        "fc2_w": w(ks[8], (FEAT2, FEAT1)),
        "fc2_b": w(ks[9], (FEAT2,)),
        "ln2_g": jnp.ones((FEAT2,), jnp.float32),
        "ln2_b": jnp.zeros((FEAT2,), jnp.float32),
    }


def pack_params(raw):
    """Pack PyTorch-layout params for the kernel.

    * LSTM input weights transposed to (in, 4H), f-gate block dropped -> (in, 3H), cast bf16.
      The i/o gate columns are additionally pre-scaled by 0.5 (sigmoid = 0.5*tanh+0.5 fold).
    * b_ih + b_hh fused into a single (3H,) f32 bias per layer (i/o entries pre-scaled by 0.5).
    * Linear weights transposed and cast bf16.
    * All eight small f32 vectors are stacked into ONE (8, 3H) slab (single DMA)."""
    H = HIDDEN

    def prune_cols(w_t):   # (in, 4H) -> (in, 3H), keep [i, g, o]; i/o pre-scaled by 0.5
        return jnp.concatenate(
            [0.5 * w_t[:, 0:H], w_t[:, 2 * H:3 * H], 0.5 * w_t[:, 3 * H:4 * H]], axis=1)

    def prune_vec(b):      # (4H,) -> (3H,); i/o pre-scaled by 0.5
        return jnp.concatenate([0.5 * b[0:H], b[2 * H:3 * H], 0.5 * b[3 * H:4 * H]])

    def row(v):            # pad to (1, 3H)
        return jnp.pad(v, (0, GATE_W - v.shape[0]))[None, :]

    vec = jnp.concatenate(
        [
            row(prune_vec(raw["bias_ih_l0"] + raw["bias_hh_l0"])),
            row(prune_vec(raw["bias_ih_l1"] + raw["bias_hh_l1"])),
            row(raw["fc1_b"]),
            row(raw["ln1_g"]),
            row(raw["ln1_b"]),
            row(raw["fc2_b"]),
            row(raw["ln2_g"]),
            row(raw["ln2_b"]),
        ],
        axis=0,
    ).astype(jnp.float32)

    # bf16 weight matrices kept as separate inputs: concatenating into a single slab would
    # require padding w1/w2 to 768 lanes (+~33% weight DMA bytes), a net loss at small batch.
    return {
        "wih0": prune_cols(raw["weight_ih_l0"].T).astype(jnp.bfloat16),
        "wih1": prune_cols(raw["weight_ih_l1"].T).astype(jnp.bfloat16),
        "w1": raw["fc1_w"].T.astype(jnp.bfloat16),
        "w2": raw["fc2_w"].T.astype(jnp.bfloat16),
        "vec": vec,
    }


def _reference(x, kp, bf16_eup):
    """Pure-JAX reference using the SAME elementwise helpers and bf16 operand rounding."""
    vec = kp["vec"]
    b0, b1 = vec[0:1, :], vec[1:2, :]
    bm1, g1, be1 = vec[2:3, :FEAT1], vec[3:4, :FEAT1], vec[4:5, :FEAT1]
    bm2, g2, be2 = vec[5:6, :FEAT2], vec[6:7, :FEAT2], vec[7:8, :FEAT2]

    def bf(a):
        return a.astype(jnp.bfloat16).astype(jnp.float32)

    def cell(xx, wih, b):
        gates = bf(xx) @ wih.astype(jnp.float32) + b
        return _lstm_gates_zero_state(gates, bf16_eup)

    h0 = cell(x, kp["wih0"], b0)
    h1 = cell(h0, kp["wih1"], b1)
    y = bf(h1) @ kp["w1"].astype(jnp.float32) + bm1
    y = jnp.maximum(_layernorm(y, g1, be1, FEAT1), 0.0)
    y = bf(y) @ kp["w2"].astype(jnp.float32) + bm2
    y = jnp.maximum(_layernorm(y, g2, be2, FEAT2), 0.0)
    return y


if __name__ == "__main__":
    key = jax.random.PRNGKey(0)
    k_x, k_p = jax.random.split(key)

    B = 8
    x = jax.random.normal(k_x, (B, STATE_SIZE), jnp.float32)
    kernel_params = pack_params(init_params(k_p, STATE_SIZE))

    bf16_eup = _bf16_eup_supported()
    out = shared_feature_extractor(x, kernel_params, bf16_eup=bf16_eup)
    out = jax.block_until_ready(out)

    ref = _reference(x, kernel_params, bf16_eup)
    assert out.shape == (B, FEAT2)
    assert jnp.allclose(out, ref, atol=2e-2, rtol=2e-2), "mismatch vs JAX reference"

    print("KERNEL_OK")
</pallas_src>

<mosaic_0001>
module attributes {stable_mosaic.version = 11 : i64} {
  func.func @shared_feature_kernel(%arg0: i32, %arg1: memref<8x32xf32, #tpu.memory_space<vmem>>, %arg2: memref<32x768xbf16, #tpu.memory_space<vmem>>, %arg3: memref<256x768xbf16, #tpu.memory_space<vmem>>, %arg4: memref<256x512xbf16, #tpu.memory_space<vmem>>, %arg5: memref<512x256xbf16, #tpu.memory_space<vmem>>, %arg6: memref<8x768xf32, #tpu.memory_space<vmem>>, %arg7: memref<8x256xf32, #tpu.memory_space<vmem>>) attributes {dimension_semantics = [#tpu.dimension_semantics<parallel>], iteration_bounds = array<i64: 1>, scalar_prefetch = 0 : i64, scratch_operands = 0 : i64, tpu.core_type = #tpu.core_type<tc>, window_params = [{transform_indices = @transform_0, window_bounds = array<i64: 8, 32>}, {pipeline_mode = #tpu.pipeline_mode<synchronous>, transform_indices = @transform_1, window_bounds = array<i64: 32, 768>}, {pipeline_mode = #tpu.pipeline_mode<synchronous>, transform_indices = @transform_2, window_bounds = array<i64: 256, 768>}, {pipeline_mode = #tpu.pipeline_mode<synchronous>, transform_indices = @transform_3, window_bounds = array<i64: 256, 512>}, {pipeline_mode = #tpu.pipeline_mode<synchronous>, transform_indices = @transform_4, window_bounds = array<i64: 512, 256>}, {pipeline_mode = #tpu.pipeline_mode<synchronous>, transform_indices = @transform_5, window_bounds = array<i64: 8, 768>}, {transform_indices = @transform_6, window_bounds = array<i64: 8, 256>}]} {
    %c0 = arith.constant 0 : index
    %c0_0 = arith.constant 0 : index
    %0 = vector.load %arg6[%c0, %c0_0] : memref<8x768xf32, #tpu.memory_space<vmem>>, vector<1x768xf32>
    %c1 = arith.constant 1 : index
    %c0_1 = arith.constant 0 : index
    %1 = vector.load %arg6[%c1, %c0_1] : memref<8x768xf32, #tpu.memory_space<vmem>>, vector<1x768xf32>
    %c2 = arith.constant 2 : index
    %c0_2 = arith.constant 0 : index
    %2 = vector.load %arg6[%c2, %c0_2] : memref<8x768xf32, #tpu.memory_space<vmem>>, vector<1x512xf32>
    %c3 = arith.constant 3 : index
    %c0_3 = arith.constant 0 : index
    %3 = vector.load %arg6[%c3, %c0_3] : memref<8x768xf32, #tpu.memory_space<vmem>>, vector<1x512xf32>
    %c4 = arith.constant 4 : index
    %c0_4 = arith.constant 0 : index
    %4 = vector.load %arg6[%c4, %c0_4] : memref<8x768xf32, #tpu.memory_space<vmem>>, vector<1x512xf32>
    %c5 = arith.constant 5 : index
    %c0_5 = arith.constant 0 : index
    %5 = vector.load %arg6[%c5, %c0_5] : memref<8x768xf32, #tpu.memory_space<vmem>>, vector<1x256xf32>
    %c6 = arith.constant 6 : index
    %c0_6 = arith.constant 0 : index
    %6 = vector.load %arg6[%c6, %c0_6] : memref<8x768xf32, #tpu.memory_space<vmem>>, vector<1x256xf32>
    %c7 = arith.constant 7 : index
    %c0_7 = arith.constant 0 : index
    %7 = vector.load %arg6[%c7, %c0_7] : memref<8x768xf32, #tpu.memory_space<vmem>>, vector<1x256xf32>
    %c0_8 = arith.constant 0 : index
    %c0_9 = arith.constant 0 : index
    %8 = vector.load %arg1[%c0_8, %c0_9] : memref<8x32xf32, #tpu.memory_space<vmem>>, vector<8x32xf32>
    %9 = arith.truncf %8 : vector<8x32xf32> to vector<8x32xbf16>
    %c0_10 = arith.constant 0 : index
    %c0_11 = arith.constant 0 : index
    %10 = vector.load %arg2[%c0_10, %c0_11] : memref<32x768xbf16, #tpu.memory_space<vmem>>, vector<32x768xbf16>
    %cst = arith.constant dense<0.000000e+00> : vector<8x768xf32>
    %11 = tpu.matmul %9, %10, %cst {dimension_numbers = #tpu.dot_dimension_numbers<[1], [0], [0], [1], [0, 0, 1, 1], [], []>} : vector<8x32xbf16>, vector<32x768xbf16>, vector<8x768xf32> -> vector<8x768xf32>
    %12 = vector.broadcast %0 : vector<1x768xf32> to vector<8x768xf32>
    %13 = arith.addf %11, %12 : vector<8x768xf32>
    %14 = vector.extract_strided_slice %13 {offsets = [0, 0], sizes = [8, 256], strides = [1, 1]} : vector<8x768xf32> to vector<8x256xf32>
    %15 = math.tanh %14 : vector<8x256xf32>
    %cst_12 = arith.constant 5.000000e-01 : f32
    %16 = vector.broadcast %cst_12 : f32 to vector<8x256xf32>
    %17 = arith.mulf %16, %15 : vector<8x256xf32>
    %cst_13 = arith.constant 5.000000e-01 : f32
    %18 = vector.broadcast %cst_13 : f32 to vector<8x256xf32>
    %19 = arith.addf %17, %18 : vector<8x256xf32>
    %20 = vector.extract_strided_slice %13 {offsets = [0, 256], sizes = [8, 256], strides = [1, 1]} : vector<8x768xf32> to vector<8x256xf32>
    %21 = math.tanh %20 : vector<8x256xf32>
    %22 = vector.extract_strided_slice %13 {offsets = [0, 512], sizes = [8, 256], strides = [1, 1]} : vector<8x768xf32> to vector<8x256xf32>
    %23 = math.tanh %22 : vector<8x256xf32>
    %cst_14 = arith.constant 5.000000e-01 : f32
    %24 = vector.broadcast %cst_14 : f32 to vector<8x256xf32>
    %25 = arith.mulf %24, %23 : vector<8x256xf32>
    %cst_15 = arith.constant 5.000000e-01 : f32
    %26 = vector.broadcast %cst_15 : f32 to vector<8x256xf32>
    %27 = arith.addf %25, %26 : vector<8x256xf32>
    %28 = arith.mulf %19, %21 : vector<8x256xf32>
    %29 = math.tanh %28 : vector<8x256xf32>
    %30 = arith.mulf %27, %29 : vector<8x256xf32>
    %31 = arith.truncf %30 : vector<8x256xf32> to vector<8x256xbf16>
    %c0_16 = arith.constant 0 : index
    %c0_17 = arith.constant 0 : index
    %32 = vector.load %arg3[%c0_16, %c0_17] : memref<256x768xbf16, #tpu.memory_space<vmem>>, vector<256x768xbf16>
    %cst_18 = arith.constant dense<0.000000e+00> : vector<8x768xf32>
    %33 = tpu.matmul %31, %32, %cst_18 {dimension_numbers = #tpu.dot_dimension_numbers<[1], [0], [0], [1], [0, 0, 1, 1], [], []>} : vector<8x256xbf16>, vector<256x768xbf16>, vector<8x768xf32> -> vector<8x768xf32>
    %34 = vector.broadcast %1 : vector<1x768xf32> to vector<8x768xf32>
    %35 = arith.addf %33, %34 : vector<8x768xf32>
    %36 = vector.extract_strided_slice %35 {offsets = [0, 0], sizes = [8, 256], strides = [1, 1]} : vector<8x768xf32> to vector<8x256xf32>
    %37 = math.tanh %36 : vector<8x256xf32>
    %cst_19 = arith.constant 5.000000e-01 : f32
    %38 = vector.broadcast %cst_19 : f32 to vector<8x256xf32>
    %39 = arith.mulf %38, %37 : vector<8x256xf32>
    %cst_20 = arith.constant 5.000000e-01 : f32
    %40 = vector.broadcast %cst_20 : f32 to vector<8x256xf32>
    %41 = arith.addf %39, %40 : vector<8x256xf32>
    %42 = vector.extract_strided_slice %35 {offsets = [0, 256], sizes = [8, 256], strides = [1, 1]} : vector<8x768xf32> to vector<8x256xf32>
    %43 = math.tanh %42 : vector<8x256xf32>
    %44 = vector.extract_strided_slice %35 {offsets = [0, 512], sizes = [8, 256], strides = [1, 1]} : vector<8x768xf32> to vector<8x256xf32>
    %45 = math.tanh %44 : vector<8x256xf32>
    %cst_21 = arith.constant 5.000000e-01 : f32
    %46 = vector.broadcast %cst_21 : f32 to vector<8x256xf32>
    %47 = arith.mulf %46, %45 : vector<8x256xf32>
    %cst_22 = arith.constant 5.000000e-01 : f32
    %48 = vector.broadcast %cst_22 : f32 to vector<8x256xf32>
    %49 = arith.addf %47, %48 : vector<8x256xf32>
    %50 = arith.mulf %41, %43 : vector<8x256xf32>
    %51 = math.tanh %50 : vector<8x256xf32>
    %52 = arith.mulf %49, %51 : vector<8x256xf32>
    %53 = arith.truncf %52 : vector<8x256xf32> to vector<8x256xbf16>
    %c0_23 = arith.constant 0 : index
    %c0_24 = arith.constant 0 : index
    %54 = vector.load %arg4[%c0_23, %c0_24] : memref<256x512xbf16, #tpu.memory_space<vmem>>, vector<256x512xbf16>
    %cst_25 = arith.constant dense<0.000000e+00> : vector<8x512xf32>
    %55 = tpu.matmul %53, %54, %cst_25 {dimension_numbers = #tpu.dot_dimension_numbers<[1], [0], [0], [1], [0, 0, 1, 1], [], []>} : vector<8x256xbf16>, vector<256x512xbf16>, vector<8x512xf32> -> vector<8x512xf32>
    %56 = vector.broadcast %2 : vector<1x512xf32> to vector<8x512xf32>
    %57 = arith.addf %55, %56 : vector<8x512xf32>
    %cst_26 = arith.constant dense<0.000000e+00> : vector<8xf32>
    %58 = vector.multi_reduction <add>, %57, %cst_26 [1] : vector<8x512xf32> to vector<8xf32>
    %59 = vector.shape_cast %58 : vector<8xf32> to vector<8x1xf32>
    %60 = arith.mulf %57, %57 : vector<8x512xf32>
    %cst_27 = arith.constant dense<0.000000e+00> : vector<8xf32>
    %61 = vector.multi_reduction <add>, %60, %cst_27 [1] : vector<8x512xf32> to vector<8xf32>
    %62 = vector.shape_cast %61 : vector<8xf32> to vector<8x1xf32>
    %cst_28 = arith.constant 0.001953125 : f32
    %63 = vector.broadcast %cst_28 : f32 to vector<8x1xf32>
    %64 = arith.mulf %59, %63 : vector<8x1xf32>
    %cst_29 = arith.constant 0.001953125 : f32
    %65 = vector.broadcast %cst_29 : f32 to vector<8x1xf32>
    %66 = arith.mulf %62, %65 : vector<8x1xf32>
    %67 = arith.mulf %64, %64 : vector<8x1xf32>
    %68 = arith.subf %66, %67 : vector<8x1xf32>
    %cst_30 = arith.constant 0.000000e+00 : f32
    %69 = vector.broadcast %cst_30 : f32 to vector<8x1xf32>
    %70 = arith.maximumf %68, %69 : vector<8x1xf32>
    %71 = vector.broadcast %64 : vector<8x1xf32> to vector<8x512xf32>
    %72 = arith.subf %57, %71 : vector<8x512xf32>
    %cst_31 = arith.constant 9.99999974E-6 : f32
    %73 = vector.broadcast %cst_31 : f32 to vector<8x1xf32>
    %74 = arith.addf %70, %73 : vector<8x1xf32>
    %75 = math.rsqrt %74 : vector<8x1xf32>
    %76 = vector.broadcast %75 : vector<8x1xf32> to vector<8x512xf32>
    %77 = arith.mulf %72, %76 : vector<8x512xf32>
    %78 = vector.broadcast %3 : vector<1x512xf32> to vector<8x512xf32>
    %79 = arith.mulf %77, %78 : vector<8x512xf32>
    %80 = vector.broadcast %4 : vector<1x512xf32> to vector<8x512xf32>
    %81 = arith.addf %79, %80 : vector<8x512xf32>
    %cst_32 = arith.constant 0.000000e+00 : f32
    %82 = vector.broadcast %cst_32 : f32 to vector<8x512xf32>
    %83 = arith.maximumf %81, %82 : vector<8x512xf32>
    %84 = arith.truncf %83 : vector<8x512xf32> to vector<8x512xbf16>
    %c0_33 = arith.constant 0 : index
    %c0_34 = arith.constant 0 : index
    %85 = vector.load %arg5[%c0_33, %c0_34] : memref<512x256xbf16, #tpu.memory_space<vmem>>, vector<512x256xbf16>
    %cst_35 = arith.constant dense<0.000000e+00> : vector<8x256xf32>
    %86 = tpu.matmul %84, %85, %cst_35 {dimension_numbers = #tpu.dot_dimension_numbers<[1], [0], [0], [1], [0, 0, 1, 1], [], []>} : vector<8x512xbf16>, vector<512x256xbf16>, vector<8x256xf32> -> vector<8x256xf32>
    %87 = vector.broadcast %5 : vector<1x256xf32> to vector<8x256xf32>
    %88 = arith.addf %86, %87 : vector<8x256xf32>
    %cst_36 = arith.constant dense<0.000000e+00> : vector<8xf32>
    %89 = vector.multi_reduction <add>, %88, %cst_36 [1] : vector<8x256xf32> to vector<8xf32>
    %90 = vector.shape_cast %89 : vector<8xf32> to vector<8x1xf32>
    %91 = arith.mulf %88, %88 : vector<8x256xf32>
    %cst_37 = arith.constant dense<0.000000e+00> : vector<8xf32>
    %92 = vector.multi_reduction <add>, %91, %cst_37 [1] : vector<8x256xf32> to vector<8xf32>
    %93 = vector.shape_cast %92 : vector<8xf32> to vector<8x1xf32>
    %cst_38 = arith.constant 3.906250e-03 : f32
    %94 = vector.broadcast %cst_38 : f32 to vector<8x1xf32>
    %95 = arith.mulf %90, %94 : vector<8x1xf32>
    %cst_39 = arith.constant 3.906250e-03 : f32
    %96 = vector.broadcast %cst_39 : f32 to vector<8x1xf32>
    %97 = arith.mulf %93, %96 : vector<8x1xf32>
    %98 = arith.mulf %95, %95 : vector<8x1xf32>
    %99 = arith.subf %97, %98 : vector<8x1xf32>
    %cst_40 = arith.constant 0.000000e+00 : f32
    %100 = vector.broadcast %cst_40 : f32 to vector<8x1xf32>
    %101 = arith.maximumf %99, %100 : vector<8x1xf32>
    %102 = vector.broadcast %95 : vector<8x1xf32> to vector<8x256xf32>
    %103 = arith.subf %88, %102 : vector<8x256xf32>
    %cst_41 = arith.constant 9.99999974E-6 : f32
    %104 = vector.broadcast %cst_41 : f32 to vector<8x1xf32>
    %105 = arith.addf %101, %104 : vector<8x1xf32>
    %106 = math.rsqrt %105 : vector<8x1xf32>
    %107 = vector.broadcast %106 : vector<8x1xf32> to vector<8x256xf32>
    %108 = arith.mulf %103, %107 : vector<8x256xf32>
    %109 = vector.broadcast %6 : vector<1x256xf32> to vector<8x256xf32>
    %110 = arith.mulf %108, %109 : vector<8x256xf32>
    %111 = vector.broadcast %7 : vector<1x256xf32> to vector<8x256xf32>
    %112 = arith.addf %110, %111 : vector<8x256xf32>
    %cst_42 = arith.constant 0.000000e+00 : f32
    %113 = vector.broadcast %cst_42 : f32 to vector<8x256xf32>
    %114 = arith.maximumf %112, %113 : vector<8x256xf32>
    %c0_43 = arith.constant 0 : index
    %c0_44 = arith.constant 0 : index
    %115 = vector.load %arg7[%c0_43, %c0_44] : memref<8x256xf32, #tpu.memory_space<vmem>>, vector<8x256xf32>
    tpu.vector_store %arg7[%c0_43, %c0_44], %114 {strides = array<i32>} : memref<8x256xf32, #tpu.memory_space<vmem>>, vector<8x256xf32>,
    return
  }
  func.func @transform_0(%arg0: i32) -> (i32, i32) {
    %c0_i32 = arith.constant 0 : i32
    %c0_i32_0 = arith.constant 0 : i32
    return %arg0, %c0_i32 : i32, i32
  }
  func.func @transform_1(%arg0: i32) -> (i32, i32) {
    %c0_i32 = arith.constant 0 : i32
    %c0_i32_0 = arith.constant 0 : i32
    %c0_i32_1 = arith.constant 0 : i32
    return %c0_i32, %c0_i32_0 : i32, i32
  }
  func.func @transform_2(%arg0: i32) -> (i32, i32) {
    %c0_i32 = arith.constant 0 : i32
    %c0_i32_0 = arith.constant 0 : i32
    %c0_i32_1 = arith.constant 0 : i32
    return %c0_i32, %c0_i32_0 : i32, i32
  }
  func.func @transform_3(%arg0: i32) -> (i32, i32) {
    %c0_i32 = arith.constant 0 : i32
    %c0_i32_0 = arith.constant 0 : i32
    %c0_i32_1 = arith.constant 0 : i32
    return %c0_i32, %c0_i32_0 : i32, i32
  }
  func.func @transform_4(%arg0: i32) -> (i32, i32) {
    %c0_i32 = arith.constant 0 : i32
    %c0_i32_0 = arith.constant 0 : i32
    %c0_i32_1 = arith.constant 0 : i32
    return %c0_i32, %c0_i32_0 : i32, i32
  }
  func.func @transform_5(%arg0: i32) -> (i32, i32) {
    %c0_i32 = arith.constant 0 : i32
    %c0_i32_0 = arith.constant 0 : i32
    %c0_i32_1 = arith.constant 0 : i32
    return %c0_i32, %c0_i32_0 : i32, i32
  }
  func.func @transform_6(%arg0: i32) -> (i32, i32) {
    %c0_i32 = arith.constant 0 : i32
    %c0_i32_0 = arith.constant 0 : i32
    return %arg0, %c0_i32 : i32, i32
  }
}

</mosaic_0001>

<llo_original>
// kernel: tpu_custom_call.1
$region0: #{tpu_custom_call.1}
  #allocation0 [shape = 'u32[]', space=smem, size = 0x4, offset = 0x4, fixed_abs, tag = 'smem constant byte address 0x4 - core index']
  #allocation1 [shape = 'u32[144,128]{1,0:T(1,128)}', space=vmem, size = 0x12000, scoped, tag = 'internal scratch']
  %s0 = inlined_call_operand.hbm [shape: f32[8,32], index: 0, kind: input, shape index: {}]
  %s1 = inlined_call_operand.hbm [shape: bf16[32,768], index: 1, kind: input, shape index: {}]
  %s2 = inlined_call_operand.hbm [shape: bf16[256,768], index: 2, kind: input, shape index: {}]
  %s3 = inlined_call_operand.hbm [shape: bf16[256,512], index: 3, kind: input, shape index: {}]
  %s4 = inlined_call_operand.hbm [shape: bf16[512,256], index: 4, kind: input, shape index: {}]
  %s5 = inlined_call_operand.hbm [shape: f32[8,768], index: 5, kind: input, shape index: {}]
  %s6 = inlined_call_operand.hbm [shape: f32[8,256], index: 6, kind: output, shape index: {}]
  %s7 = sld [smem:[#allocation0]]
  $region58: #{tpu_custom_call.1} parent=0
    _
  %s9 = ssub.s32 1, %s7
  %s10 = scalar_select 0, %s9, %s7
  $region1: #{tpu_custom_call.1} parent=0
    #allocation2 [shape = 'u8[4096]{0}', space=vmem, size = 0x1000, scoped, tag = 'input window, operand 0, single buffered']
    #allocation3 [shape = 's32[1]{0}', space=sflag, size = 0x4, scoped, tag = 'scoped memory for tpu_custom_call.1']
    #allocation4 [shape = 's32[1]{0}', space=sflag, size = 0x4, scoped, tag = 'scoped memory for tpu_custom_call.1']
    #allocation5 [shape = 'u8[49152]{0}', space=vmem, size = 0xc000, scoped, tag = 'input window, operand 1, single buffered']
    #allocation6 [shape = 's32[1]{0}', space=sflag, size = 0x4, scoped, tag = 'scoped memory for tpu_custom_call.1']
    #allocation7 [shape = 'u8[393216]{0}', space=vmem, size = 0x60000, scoped, tag = 'input window, operand 2, single buffered']
    #allocation8 [shape = 'u8[262144]{0}', space=vmem, size = 0x40000, scoped, tag = 'input window, operand 3, single buffered']
    #allocation9 [shape = 's32[1]{0}', space=sflag, size = 0x4, scoped, tag = 'scoped memory for tpu_custom_call.1']
    #allocation10 [shape = 'u8[262144]{0}', space=vmem, size = 0x40000, scoped, tag = 'input window, operand 4, single buffered']
    #allocation11 [shape = 'u8[24576]{0}', space=vmem, size = 0x6000, scoped, tag = 'input window, operand 5, single buffered']
    #allocation12 [shape = 's32[1]{0}', space=sflag, size = 0x4, scoped, tag = 'scoped memory for tpu_custom_call.1']
    #allocation13 [shape = 'u8[8192]{0}', space=vmem, size = 0x2000, scoped, tag = 'output window, operand 0, single buffered']
    %11 = vsyncpa [#allocation3], 0
    %12 = vsyncpa [#allocation6], 0
    %13 = vsyncpa [#allocation9], 0
    %14 = vsyncpa [#allocation12], 0
    %15 = vsyncpa [#allocation4], 0
    // Predicated region
    $region2: #{tpu_custom_call.1} parent=1 // pred_check
      _
    $region3: #{tpu_custom_call.1} parent=1 // pred_check_branch
      %17 = sbr.rel (0) target = $region5
    $region4: #{tpu_custom_call.1} parent=1 // pred_region
      %s19 = ssub.s32 128, 128
      %20 = vsyncadd [#allocation3], %s19
      %s22 = sshll.u32 [#allocation2], 4
      %s23 = int_to_ptr.vmem [resolvable:$true] %s22
      %25 = dma.hbm_to_vmem [thread:$0]  %s0, 128, %s23, [#allocation3]
    $region5: #{tpu_custom_call.1} parent=1 // pred_fallthru
      _
    // Predicated region
    $region6: #{tpu_custom_call.1} parent=1 // pred_check
      _
    $region7: #{tpu_custom_call.1} parent=1 // pred_check_branch
      %27 = sbr.rel (0) target = $region9
    $region8: #{tpu_custom_call.1} parent=1 // pred_region
      %s29 = ssub.s32 1536, 1536
      %30 = vsyncadd [#allocation6], %s29
      %s31 = sshll.u32 [#allocation5], 4
      %s32 = int_to_ptr.vmem [resolvable:$true] %s31
      %37 = dma.hbm_to_vmem [thread:$0]  %s1, 1536, %s32, [#allocation6], 384, 384, 24
    $region9: #{tpu_custom_call.1} parent=1 // pred_fallthru
      _
    // Predicated region
    $region10: #{tpu_custom_call.1} parent=1 // pred_check
      _
    $region11: #{tpu_custom_call.1} parent=1 // pred_check_branch
      %39 = sbr.rel (0) target = $region13
    $region12: #{tpu_custom_call.1} parent=1 // pred_region
      %s41 = ssub.s32 12288, 12288
      %42 = vsyncadd [#allocation6], %s41
      %s43 = sshll.u32 [#allocation7], 4
      %s44 = int_to_ptr.vmem [resolvable:$true] %s43
      %49 = dma.hbm_to_vmem [thread:$0]  %s2, 12288, %s44, [#allocation6], 384, 384, 24
    $region13: #{tpu_custom_call.1} parent=1 // pred_fallthru
      _
    // Predicated region
    $region14: #{tpu_custom_call.1} parent=1 // pred_check
      _
    $region15: #{tpu_custom_call.1} parent=1 // pred_check_branch
      %51 = sbr.rel (0) target = $region17
    $region16: #{tpu_custom_call.1} parent=1 // pred_region
      %s53 = ssub.s32 8192, 8192
      %54 = vsyncadd [#allocation9], %s53
      %s55 = sshll.u32 [#allocation8], 4
      %s56 = int_to_ptr.vmem [resolvable:$true] %s55
      %61 = dma.hbm_to_vmem [thread:$0]  %s3, 8192, %s56, [#allocation9], 256, 256, 16
    $region17: #{tpu_custom_call.1} parent=1 // pred_fallthru
      _
    // Predicated region
    $region18: #{tpu_custom_call.1} parent=1 // pred_check
      _
    $region19: #{tpu_custom_call.1} parent=1 // pred_check_branch
      %63 = sbr.rel (0) target = $region21
    $region20: #{tpu_custom_call.1} parent=1 // pred_region
      %s65 = ssub.s32 8192, 8192
      %66 = vsyncadd [#allocation9], %s65
      %s67 = sshll.u32 [#allocation10], 4
      %s68 = int_to_ptr.vmem [resolvable:$true] %s67
      %73 = dma.hbm_to_vmem [thread:$0]  %s4, 8192, %s68, [#allocation9], 128, 128, 8
    $region21: #{tpu_custom_call.1} parent=1 // pred_fallthru
      _
    // Predicated region
    $region22: #{tpu_custom_call.1} parent=1 // pred_check
      _
    $region23: #{tpu_custom_call.1} parent=1 // pred_check_branch
      %75 = sbr.rel (0) target = $region25
    $region24: #{tpu_custom_call.1} parent=1 // pred_region
      %s77 = ssub.s32 768, 768
      %78 = vsyncadd [#allocation12], %s77
      %s80 = sshll.u32 [#allocation11], 4
      %s81 = int_to_ptr.vmem [resolvable:$true] %s80
      %83 = dma.hbm_to_vmem [thread:$0]  %s5, 768, %s81, [#allocation12]
    $region25: #{tpu_custom_call.1} parent=1 // pred_fallthru
      _
    // Predicated region
    $region26: #{tpu_custom_call.1} parent=1 // pred_check
      _
    $region27: #{tpu_custom_call.1} parent=1 // pred_check_branch
      %85 = sbr.rel (0) target = $region29
    $region28: #{tpu_custom_call.1} parent=1 // pred_region
      %86 = dma.done [#allocation3], 128
    $region29: #{tpu_custom_call.1} parent=1 // pred_fallthru
      _
    // Predicated region
    $region30: #{tpu_custom_call.1} parent=1 // pred_check
      _
    $region31: #{tpu_custom_call.1} parent=1 // pred_check_branch
      %88 = sbr.rel (0) target = $region33
    $region32: #{tpu_custom_call.1} parent=1 // pred_region
      %89 = dma.done [#allocation6], 1536
    $region33: #{tpu_custom_call.1} parent=1 // pred_fallthru
      _
    // Predicated region
    $region34: #{tpu_custom_call.1} parent=1 // pred_check
      _
    $region35: #{tpu_custom_call.1} parent=1 // pred_check_branch
      %91 = sbr.rel (0) target = $region37
    $region36: #{tpu_custom_call.1} parent=1 // pred_region
      %92 = dma.done [#allocation6], 12288
    $region37: #{tpu_custom_call.1} parent=1 // pred_fallthru
      _
    // Predicated region
    $region38: #{tpu_custom_call.1} parent=1 // pred_check
      _
    $region39: #{tpu_custom_call.1} parent=1 // pred_check_branch
      %94 = sbr.rel (0) target = $region41
    $region40: #{tpu_custom_call.1} parent=1 // pred_region
      %95 = dma.done [#allocation9], 8192
    $region41: #{tpu_custom_call.1} parent=1 // pred_fallthru
      _
    // Predicated region
    $region42: #{tpu_custom_call.1} parent=1 // pred_check
      _
    $region43: #{tpu_custom_call.1} parent=1 // pred_check_branch
      %97 = sbr.rel (0) target = $region45
    $region44: #{tpu_custom_call.1} parent=1 // pred_region
      %98 = dma.done [#allocation9], 8192
    $region45: #{tpu_custom_call.1} parent=1 // pred_fallthru
      _
    // Predicated region
    $region46: #{tpu_custom_call.1} parent=1 // pred_check
      _
    $region47: #{tpu_custom_call.1} parent=1 // pred_check_branch
      %100 = sbr.rel (0) target = $region49
    $region48: #{tpu_custom_call.1} parent=1 // pred_region
      %101 = dma.done [#allocation12], 768
    $region49: #{tpu_custom_call.1} parent=1 // pred_fallthru
      _
    %v103 = vld [vmem:[#allocation11] ss:$8 sm:$0xf]
    %v104 = vld [vmem:[#allocation11] ss:$8 sm:$0x30]
    %v105 = vor.u32 %v103, %v104
    %s106 = scalar_lea.vmem [#allocation11], 1
    %v107 = vld [vmem:[%s106] ss:$8 sm:$0xf]
    %v108 = vld [vmem:[%s106] ss:$8 sm:$0x30]
    %v109 = vor.u32 %v107, %v108
    %s110 = scalar_lea.vmem [#allocation11], 2
    %v111 = vld [vmem:[%s110] ss:$8 sm:$0xf]
    %s112 = scalar_lea.vmem [#allocation11], 3
    %v113 = vld [vmem:[%s112] ss:$8 sm:$0xf]
    %s114 = scalar_lea.vmem [#allocation11], 4
    %v115 = vld [vmem:[%s114] ss:$8 sm:$0xf]
    %s116 = scalar_lea.vmem [#allocation11], 5
    %v117 = vld [vmem:[%s116] ss:$8 sm:$0x3]
    %s118 = scalar_lea.vmem [#allocation11], 6
    %v119 = vld [vmem:[%s118] ss:$8 sm:$0x3]
    %s120 = scalar_lea.vmem [#allocation11], 7
    %v121 = vld [vmem:[%s120] ss:$8 sm:$0x3]
    %v122 = vld [vmem:[#allocation2] sm:$0xff]
    %v123 = vpack.c.bf16 %v122, %v122
    %v124 = vld [vmem:[#allocation5] sm:$0xff]
    %v125 = vld [vmem:[#allocation5 + $0x8] sm:$0xff]
    %v126 = vld [vmem:[#allocation5 + $0x10] sm:$0xff]
    %v127 = vld [vmem:[#allocation5 + $0x18] sm:$0xff]
    %v128 = vld [vmem:[#allocation5 + $0x20] sm:$0xff]
    %v129 = vld [vmem:[#allocation5 + $0x28] sm:$0xff]
    %v130 = vld [vmem:[#allocation5 + $0x30] sm:$0xff]
    %v131 = vld [vmem:[#allocation5 + $0x38] sm:$0xff]
    %v132 = vld [vmem:[#allocation5 + $0x40] sm:$0xff]
    %v133 = vld [vmem:[#allocation5 + $0x48] sm:$0xff]
    %v134 = vld [vmem:[#allocation5 + $0x50] sm:$0xff]
    %v135 = vld [vmem:[#allocation5 + $0x58] sm:$0xff]
    %v137 = vlaneseq
    %v138 = vshrl.u32 %v137, 7
    %v139 = vsub.s32 0, %v138
    %v140 = vrot.slane %v105, %v139
    %v141 = vlaneseq
    %v142 = vshrl.u32 %v141, 7
    %v143 = vsub.s32 1, %v142
    %v144 = vrot.slane %v105, %v143
    %v145 = vlaneseq
    %v146 = vshrl.u32 %v145, 7
    %v147 = vsub.s32 2, %v146
    %v148 = vrot.slane %v105, %v147
    %v149 = vlaneseq
    %v150 = vshrl.u32 %v149, 7
    %v151 = vsub.s32 3, %v150
    %v152 = vrot.slane %v105, %v151
    %v153 = vlaneseq
    %v154 = vshrl.u32 %v153, 7
    %v155 = vsub.s32 4, %v154
    %v156 = vrot.slane %v105, %v155
    %v157 = vlaneseq
    %v158 = vshrl.u32 %v157, 7
    %v159 = vsub.s32 5, %v158
    %v160 = vrot.slane %v105, %v159
    %v179 = vunpack.c.l.b16 %v124
    %v180 = vunpack.c.h.b16 %v124
    %v181 = vunpack.c.l.b16 %v125
    %v182 = vunpack.c.h.b16 %v125
    %v183 = vunpack.c.l.b16 %v126
    %v184 = vunpack.c.h.b16 %v126
    %v185 = vunpack.c.l.b16 %v127
    %v186 = vunpack.c.h.b16 %v127
    %v187 = vunpack.c.l.b16 %v128
    %v188 = vunpack.c.h.b16 %v128
    %v189 = vunpack.c.l.b16 %v129
    %v190 = vunpack.c.h.b16 %v129
    %v191 = vunpack.c.l.b16 %v130
    %v192 = vunpack.c.h.b16 %v130
    %v193 = vunpack.c.l.b16 %v131
    %v194 = vunpack.c.h.b16 %v131
    %v195 = vunpack.c.l.b16 %v132
    %v196 = vunpack.c.h.b16 %v132
    %v197 = vunpack.c.l.b16 %v133
    %v198 = vunpack.c.h.b16 %v133
    %v199 = vunpack.c.l.b16 %v134
    %v200 = vunpack.c.h.b16 %v134
    %v201 = vunpack.c.l.b16 %v135
    %v202 = vunpack.c.h.b16 %v135
    %v203 = vpack.c.b16 %v185, %v179
    %v204 = vpack.c.b16 %v186, %v180
    %v205 = vpack.c.b16 %v187, %v181
    %v206 = vpack.c.b16 %v188, %v182
    %v207 = vpack.c.b16 %v189, %v183
    %v208 = vpack.c.b16 %v190, %v184
    %v209 = vpack.c.b16 %v197, %v191
    %v210 = vpack.c.b16 %v198, %v192
    %v211 = vpack.c.b16 %v199, %v193
    %v212 = vpack.c.b16 %v200, %v194
    %v213 = vpack.c.b16 %v201, %v195
    %v214 = vpack.c.b16 %v202, %v196
    %vm227 = vcmask 261120
    %v229 = vsel %vm227, %v123, 0
    %231 = vmatprep.subr.bf16.mxu0 %v204
    %232 = vmatpush1.bf16.msra.mxu0 %v203
    %233 = vmatprep.subr.bf16.mxu0 %v210
    %234 = vmatpush1.bf16.msra.mxu0 %v209
    %235 = vmatprep.subr.bf16.mxu0 0
    %236 = vmatpush1.bf16.msra.mxu0 0
    %237 = vmatprep.subr.bf16.mxu0 0
    %238 = vmatpush1.bf16.msra.mxu0 0
    %239 = vmatprep.subr.bf16.mxu0 0
    %240 = vmatpush1.bf16.msra.mxu0 0
    %241 = vmatprep.subr.bf16.mxu0 0
    %242 = vmatpush1.bf16.msra.mxu0 0
    %243 = vmatprep.subr.bf16.mxu0 0
    %244 = vmatpush1.bf16.msra.mxu0 0
    %245 = vmatprep.subr.bf16.mxu0 0
    %246 = vmatpush1.bf16.msra.mxu0 0
    %247 = vmatprep.subr.bf16.mxu0 0
    %248 = vmatpush1.bf16.msra.mxu0 0
    %249 = vmatprep.subr.bf16.mxu0 0
    %250 = vmatpush1.bf16.msra.mxu0 0
    %251 = vmatprep.subr.bf16.mxu0 0
    %252 = vmatpush1.bf16.msra.mxu0 0
    %253 = vmatprep.subr.bf16.mxu0 0
    %254 = vmatpush1.bf16.msra.mxu0 0
    %255 = vmatprep.subr.bf16.mxu0 0
    %256 = vmatpush1.bf16.msra.mxu0 0
    %257 = vmatprep.subr.bf16.mxu0 0
    %258 = vmatpush1.bf16.msra.mxu0 0
    %259 = vmatprep.subr.bf16.mxu0 0
    %260 = vmatpush1.bf16.msra.mxu0 0
    %261 = vmatprep.subr.bf16.mxu0 0
    %262 = vmatpush1.bf16.msra.mxu0 0
    %263 = vmatprep.mubr.bf16.mxu0 0
    %264 = vmatmul.mubr.bf16.gmra.mrb[0].mxu0 %v229
    %v265 = vpop.f32.mrb[0].mxu0
    %v266 = vadd.f32 %v140, %v265
    %v267 = vpop.f32.mrb[0].mxu0
    %v268 = vadd.f32 %v144, %v267
    %v269 = vpop.f32.mrb[0].mxu0
    %v270 = vpop.f32.mrb[0].mxu0
    %271 = vdwg.mxu0
    %272 = vmatprep.subr.bf16.mxu0 %v206
    %273 = vmatpush1.bf16.msra.mxu0 %v205
    %274 = vmatprep.subr.bf16.mxu0 %v212
    %275 = vmatpush1.bf16.msra.mxu0 %v211
    %276 = vmatprep.subr.bf16.mxu0 0
    %277 = vmatpush1.bf16.msra.mxu0 0
    %278 = vmatprep.subr.bf16.mxu0 0
    %279 = vmatpush1.bf16.msra.mxu0 0
    %280 = vmatprep.subr.bf16.mxu0 0
    %281 = vmatpush1.bf16.msra.mxu0 0
    %282 = vmatprep.subr.bf16.mxu0 0
    %283 = vmatpush1.bf16.msra.mxu0 0
    %284 = vmatprep.subr.bf16.mxu0 0
    %285 = vmatpush1.bf16.msra.mxu0 0
    %286 = vmatprep.subr.bf16.mxu0 0
    %287 = vmatpush1.bf16.msra.mxu0 0
    %288 = vmatprep.subr.bf16.mxu0 0
    %289 = vmatpush1.bf16.msra.mxu0 0
    %290 = vmatprep.subr.bf16.mxu0 0
    %291 = vmatpush1.bf16.msra.mxu0 0
    %292 = vmatprep.subr.bf16.mxu0 0
    %293 = vmatpush1.bf16.msra.mxu0 0
    %294 = vmatprep.subr.bf16.mxu0 0
    %295 = vmatpush1.bf16.msra.mxu0 0
    %296 = vmatprep.subr.bf16.mxu0 0
    %297 = vmatpush1.bf16.msra.mxu0 0
    %298 = vmatprep.subr.bf16.mxu0 0
    %299 = vmatpush1.bf16.msra.mxu0 0
    %300 = vmatprep.subr.bf16.mxu0 0
    %301 = vmatpush1.bf16.msra.mxu0 0
    %302 = vmatprep.subr.bf16.mxu0 0
    %303 = vmatpush1.bf16.msra.mxu0 0
    %304 = vmatprep.mubr.bf16.mxu0 0
    %305 = vmatmul.mubr.bf16.gmra.mrb[0].mxu0 %v229
    %v306 = vpop.f32.mrb[0].mxu0
    %v307 = vadd.f32 %v148, %v306
    %v308 = vpop.f32.mrb[0].mxu0
    %v309 = vadd.f32 %v152, %v308
    %v310 = vpop.f32.mrb[0].mxu0
    %v311 = vpop.f32.mrb[0].mxu0
    %312 = vdwg.mxu0
    %313 = vmatprep.subr.bf16.mxu0 %v208
    %314 = vmatpush1.bf16.msra.mxu0 %v207
    %315 = vmatprep.subr.bf16.mxu0 %v214
    %316 = vmatpush1.bf16.msra.mxu0 %v213
    %317 = vmatprep.subr.bf16.mxu0 0
    %318 = vmatpush1.bf16.msra.mxu0 0
    %319 = vmatprep.subr.bf16.mxu0 0
    %320 = vmatpush1.bf16.msra.mxu0 0
    %321 = vmatprep.subr.bf16.mxu0 0
    %322 = vmatpush1.bf16.msra.mxu0 0
    %323 = vmatprep.subr.bf16.mxu0 0
    %324 = vmatpush1.bf16.msra.mxu0 0
    %325 = vmatprep.subr.bf16.mxu0 0
    %326 = vmatpush1.bf16.msra.mxu0 0
    %327 = vmatprep.subr.bf16.mxu0 0
    %328 = vmatpush1.bf16.msra.mxu0 0
    %329 = vmatprep.subr.bf16.mxu0 0
    %330 = vmatpush1.bf16.msra.mxu0 0
    %331 = vmatprep.subr.bf16.mxu0 0
    %332 = vmatpush1.bf16.msra.mxu0 0
    %333 = vmatprep.subr.bf16.mxu0 0
    %334 = vmatpush1.bf16.msra.mxu0 0
    %335 = vmatprep.subr.bf16.mxu0 0
    %336 = vmatpush1.bf16.msra.mxu0 0
    %337 = vmatprep.subr.bf16.mxu0 0
    %338 = vmatpush1.bf16.msra.mxu0 0
    %339 = vmatprep.subr.bf16.mxu0 0
    %340 = vmatpush1.bf16.msra.mxu0 0
    %341 = vmatprep.subr.bf16.mxu0 0
    %342 = vmatpush1.bf16.msra.mxu0 0
    %343 = vmatprep.subr.bf16.mxu0 0
    %344 = vmatpush1.bf16.msra.mxu0 0
    %345 = vmatprep.mubr.bf16.mxu0 0
    %346 = vmatmul.mubr.bf16.gmra.mrb[0].mxu0 %v229
    %v347 = vpop.f32.mrb[0].mxu0
    %v348 = vadd.f32 %v156, %v347
    %v349 = vpop.f32.mrb[0].mxu0
    %v350 = vadd.f32 %v160, %v349
    %v351 = vpop.f32.mrb[0].mxu0
    %v352 = vpop.f32.mrb[0].mxu0
    %353 = vdwg.mxu0
    %v354 = vtanh.pop %v266
    %v355 = vtanh.pop %v268
    %v356 = vmul.f32 %v354, 0.5
    %v357 = vmul.f32 %v355, 0.5
    %v358 = vadd.f32 %v356, 0.5
    %v359 = vadd.f32 %v357, 0.5
    %v360 = vtanh.pop %v307
    %v361 = vtanh.pop %v309
    %v362 = vtanh.pop %v348
    %v363 = vtanh.pop %v350
    %v364 = vmul.f32 %v362, 0.5
    %v365 = vmul.f32 %v363, 0.5
    %v366 = vadd.f32 %v364, 0.5
    %v367 = vadd.f32 %v365, 0.5
    %v368 = vmul.f32 %v358, %v360
    %v369 = vmul.f32 %v359, %v361
    %v370 = vtanh.pop %v368
    %v371 = vtanh.pop %v369
    %v372 = vmul.f32 %v366, %v370
    %v373 = vmul.f32 %v367, %v371
    %v374 = vpack.c.bf16 %v372, %v372
    %v375 = vpack.c.bf16 %v373, %v373
    %v376 = vld [vmem:[#allocation7] sm:$0xff]
    %v377 = vld [vmem:[#allocation7 + $0x8] sm:$0xff]
    %v378 = vld [vmem:[#allocation7 + $0x10] sm:$0xff]
    %v379 = vld [vmem:[#allocation7 + $0x18] sm:$0xff]
    %v380 = vld [vmem:[#allocation7 + $0x20] sm:$0xff]
    %v381 = vld [vmem:[#allocation7 + $0x28] sm:$0xff]
    %v382 = vld [vmem:[#allocation7 + $0x30] sm:$0xff]
    %v383 = vld [vmem:[#allocation7 + $0x38] sm:$0xff]
    %v384 = vld [vmem:[#allocation7 + $0x40] sm:$0xff]
    %v385 = vld [vmem:[#allocation7 + $0x48] sm:$0xff]
    %v386 = vld [vmem:[#allocation7 + $0x50] sm:$0xff]
    %v387 = vld [vmem:[#allocation7 + $0x58] sm:$0xff]
    %v388 = vld [vmem:[#allocation7 + $0x60] sm:$0xff]
    %v389 = vld [vmem:[#allocation7 + $0x68] sm:$0xff]
    %v390 = vld [vmem:[#allocation7 + $0x70] sm:$0xff]
    %v391 = vld [vmem:[#allocation7 + $0x78] sm:$0xff]
    %v392 = vld [vmem:[#allocation7 + $0x80] sm:$0xff]
    %v393 = vld [vmem:[#allocation7 + $0x88] sm:$0xff]
    %v394 = vld [vmem:[#allocation7 + $0x90] sm:$0xff]
    %v395 = vld [vmem:[#allocation7 + $0x98] sm:$0xff]
    %v396 = vld [vmem:[#allocation7 + $0xa0] sm:$0xff]
    %v397 = vld [vmem:[#allocation7 + $0xa8] sm:$0xff]
    %v398 = vld [vmem:[#allocation7 + $0xb0] sm:$0xff]
    %v399 = vld [vmem:[#allocation7 + $0xb8] sm:$0xff]
    %v400 = vld [vmem:[#allocation7 + $0xc0] sm:$0xff]
    %v401 = vld [vmem:[#allocation7 + $0xc8] sm:$0xff]
    %v402 = vld [vmem:[#allocation7 + $0xd0] sm:$0xff]
    %v403 = vld [vmem:[#allocation7 + $0xd8] sm:$0xff]
    %v404 = vld [vmem:[#allocation7 + $0xe0] sm:$0xff]
    %v405 = vld [vmem:[#allocation7 + $0xe8] sm:$0xff]
    %v406 = vld [vmem:[#allocation7 + $0xf0] sm:$0xff]
    %v407 = vld [vmem:[#allocation7 + $0xf8] sm:$0xff]
    %v408 = vld [vmem:[#allocation7 + $0x100] sm:$0xff]
    %v409 = vld [vmem:[#allocation7 + $0x108] sm:$0xff]
    %v410 = vld [vmem:[#allocation7 + $0x110] sm:$0xff]
    %v411 = vld [vmem:[#allocation7 + $0x118] sm:$0xff]
    %v412 = vld [vmem:[#allocation7 + $0x120] sm:$0xff]
    %v413 = vld [vmem:[#allocation7 + $0x128] sm:$0xff]
    %v414 = vld [vmem:[#allocation7 + $0x130] sm:$0xff]
    %v415 = vld [vmem:[#allocation7 + $0x138] sm:$0xff]
    %v416 = vld [vmem:[#allocation7 + $0x140] sm:$0xff]
    %v417 = vld [vmem:[#allocation7 + $0x148] sm:$0xff]
    %v418 = vld [vmem:[#allocation7 + $0x150] sm:$0xff]
    %v419 = vld [vmem:[#allocation7 + $0x158] sm:$0xff]
    %v420 = vld [vmem:[#allocation7 + $0x160] sm:$0xff]
    %v421 = vld [vmem:[#allocation7 + $0x168] sm:$0xff]
    %v422 = vld [vmem:[#allocation7 + $0x170] sm:$0xff]
    %v423 = vld [vmem:[#allocation7 + $0x178] sm:$0xff]
    %v424 = vld [vmem:[#allocation7 + $0x180] sm:$0xff]
    %v425 = vld [vmem:[#allocation7 + $0x188] sm:$0xff]
    %v426 = vld [vmem:[#allocation7 + $0x190] sm:$0xff]
    %v427 = vld [vmem:[#allocation7 + $0x198] sm:$0xff]
    %v428 = vld [vmem:[#allocation7 + $0x1a0] sm:$0xff]
    %v429 = vld [vmem:[#allocation7 + $0x1a8] sm:$0xff]
    %v430 = vld [vmem:[#allocation7 + $0x1b0] sm:$0xff]
    %v431 = vld [vmem:[#allocation7 + $0x1b8] sm:$0xff]
    %v432 = vld [vmem:[#allocation7 + $0x1c0] sm:$0xff]
    %v433 = vld [vmem:[#allocation7 + $0x1c8] sm:$0xff]
    %v434 = vld [vmem:[#allocation7 + $0x1d0] sm:$0xff]
    %v435 = vld [vmem:[#allocation7 + $0x1d8] sm:$0xff]
    %v436 = vld [vmem:[#allocation7 + $0x1e0] sm:$0xff]
    %v437 = vld [vmem:[#allocation7 + $0x1e8] sm:$0xff]
    %v438 = vld [vmem:[#allocation7 + $0x1f0] sm:$0xff]
    %v439 = vld [vmem:[#allocation7 + $0x1f8] sm:$0xff]
    %v440 = vld [vmem:[#allocation7 + $0x200] sm:$0xff]
    %v441 = vld [vmem:[#allocation7 + $0x208] sm:$0xff]
    %v442 = vld [vmem:[#allocation7 + $0x210] sm:$0xff]
    %v443 = vld [vmem:[#allocation7 + $0x218] sm:$0xff]
    %v444 = vld [vmem:[#allocation7 + $0x220] sm:$0xff]
    %v445 = vld [vmem:[#allocation7 + $0x228] sm:$0xff]
    %v446 = vld [vmem:[#allocation7 + $0x230] sm:$0xff]
    %v447 = vld [vmem:[#allocation7 + $0x238] sm:$0xff]
    %v448 = vld [vmem:[#allocation7 + $0x240] sm:$0xff]
    %v449 = vld [vmem:[#allocation7 + $0x248] sm:$0xff]
    %v450 = vld [vmem:[#allocation7 + $0x250] sm:$0xff]
    %v451 = vld [vmem:[#allocation7 + $0x258] sm:$0xff]
    %v452 = vld [vmem:[#allocation7 + $0x260] sm:$0xff]
    %v453 = vld [vmem:[#allocation7 + $0x268] sm:$0xff]
    %v454 = vld [vmem:[#allocation7 + $0x270] sm:$0xff]
    %v455 = vld [vmem:[#allocation7 + $0x278] sm:$0xff]
    %v456 = vld [vmem:[#allocation7 + $0x280] sm:$0xff]
    %v457 = vld [vmem:[#allocation7 + $0x288] sm:$0xff]
    %v458 = vld [vmem:[#allocation7 + $0x290] sm:$0xff]
    %v459 = vld [vmem:[#allocation7 + $0x298] sm:$0xff]
    %v460 = vld [vmem:[#allocation7 + $0x2a0] sm:$0xff]
    %v461 = vld [vmem:[#allocation7 + $0x2a8] sm:$0xff]
    %v462 = vld [vmem:[#allocation7 + $0x2b0] sm:$0xff]
    %v463 = vld [vmem:[#allocation7 + $0x2b8] sm:$0xff]
    %v464 = vld [vmem:[#allocation7 + $0x2c0] sm:$0xff]
    %v465 = vld [vmem:[#allocation7 + $0x2c8] sm:$0xff]
    %v466 = vld [vmem:[#allocation7 + $0x2d0] sm:$0xff]
    %v467 = vld [vmem:[#allocation7 + $0x2d8] sm:$0xff]
    %v468 = vld [vmem:[#allocation7 + $0x2e0] sm:$0xff]
    %v469 = vld [vmem:[#allocation7 + $0x2e8] sm:$0xff]
    %v470 = vld [vmem:[#allocation7 + $0x2f0] sm:$0xff]
    %v471 = vld [vmem:[#allocation7 + $0x2f8] sm:$0xff]
    %v473 = vlaneseq
    %v474 = vshrl.u32 %v473, 7
    %v475 = vsub.s32 0, %v474
    %v476 = vrot.slane %v109, %v475
    %v477 = vlaneseq
    %v478 = vshrl.u32 %v477, 7
    %v479 = vsub.s32 1, %v478
    %v480 = vrot.slane %v109, %v479
    %v481 = vlaneseq
    %v482 = vshrl.u32 %v481, 7
    %v483 = vsub.s32 2, %v482
    %v484 = vrot.slane %v109, %v483
    %v485 = vlaneseq
    %v486 = vshrl.u32 %v485, 7
    %v487 = vsub.s32 3, %v486
    %v488 = vrot.slane %v109, %v487
    %v489 = vlaneseq
    %v490 = vshrl.u32 %v489, 7
    %v491 = vsub.s32 4, %v490
    %v492 = vrot.slane %v109, %v491
    %v493 = vlaneseq
    %v494 = vshrl.u32 %v493, 7
    %v495 = vsub.s32 5, %v494
    %v496 = vrot.slane %v109, %v495
    %v599 = vunpack.c.l.b16 %v376
    %v600 = vunpack.c.h.b16 %v376
    %v601 = vunpack.c.l.b16 %v377
    %v602 = vunpack.c.h.b16 %v377
    %v603 = vunpack.c.l.b16 %v378
    %v604 = vunpack.c.h.b16 %v378
    %v605 = vunpack.c.l.b16 %v379
    %v606 = vunpack.c.h.b16 %v379
    %v607 = vunpack.c.l.b16 %v380
    %v608 = vunpack.c.h.b16 %v380
    %v609 = vunpack.c.l.b16 %v381
    %v610 = vunpack.c.h.b16 %v381
    %v611 = vunpack.c.l.b16 %v382
    %v612 = vunpack.c.h.b16 %v382
    %v613 = vunpack.c.l.b16 %v383
    %v614 = vunpack.c.h.b16 %v383
    %v615 = vunpack.c.l.b16 %v384
    %v616 = vunpack.c.h.b16 %v384
    %v617 = vunpack.c.l.b16 %v385
    %v618 = vunpack.c.h.b16 %v385
    %v619 = vunpack.c.l.b16 %v386
    %v620 = vunpack.c.h.b16 %v386
    %v621 = vunpack.c.l.b16 %v387
    %v622 = vunpack.c.h.b16 %v387
    %v623 = vunpack.c.l.b16 %v388
    %v624 = vunpack.c.h.b16 %v388
    %v625 = vunpack.c.l.b16 %v389
    %v626 = vunpack.c.h.b16 %v389
    %v627 = vunpack.c.l.b16 %v390
    %v628 = vunpack.c.h.b16 %v390
    %v629 = vunpack.c.l.b16 %v391
    %v630 = vunpack.c.h.b16 %v391
    %v631 = vunpack.c.l.b16 %v392
    %v632 = vunpack.c.h.b16 %v392
    %v633 = vunpack.c.l.b16 %v393
    %v634 = vunpack.c.h.b16 %v393
    %v635 = vunpack.c.l.b16 %v394
    %v636 = vunpack.c.h.b16 %v394
    %v637 = vunpack.c.l.b16 %v395
    %v638 = vunpack.c.h.b16 %v395
    %v639 = vunpack.c.l.b16 %v396
    %v640 = vunpack.c.h.b16 %v396
    %v641 = vunpack.c.l.b16 %v397
    %v642 = vunpack.c.h.b16 %v397
    %v643 = vunpack.c.l.b16 %v398
    %v644 = vunpack.c.h.b16 %v398
    %v645 = vunpack.c.l.b16 %v399
    %v646 = vunpack.c.h.b16 %v399
    %v647 = vunpack.c.l.b16 %v400
    %v648 = vunpack.c.h.b16 %v400
    %v649 = vunpack.c.l.b16 %v401
    %v650 = vunpack.c.h.b16 %v401
    %v651 = vunpack.c.l.b16 %v402
    %v652 = vunpack.c.h.b16 %v402
    %v653 = vunpack.c.l.b16 %v403
    %v654 = vunpack.c.h.b16 %v403
    %v655 = vunpack.c.l.b16 %v404
    %v656 = vunpack.c.h.b16 %v404
    %v657 = vunpack.c.l.b16 %v405
    %v658 = vunpack.c.h.b16 %v405
    %v659 = vunpack.c.l.b16 %v406
    %v660 = vunpack.c.h.b16 %v406
    %v661 = vunpack.c.l.b16 %v407
    %v662 = vunpack.c.h.b16 %v407
    %v663 = vunpack.c.l.b16 %v408
    %v664 = vunpack.c.h.b16 %v408
    %v665 = vunpack.c.l.b16 %v409
    %v666 = vunpack.c.h.b16 %v409
    %v667 = vunpack.c.l.b16 %v410
    %v668 = vunpack.c.h.b16 %v410
    %v669 = vunpack.c.l.b16 %v411
    %v670 = vunpack.c.h.b16 %v411
    %v671 = vunpack.c.l.b16 %v412
    %v672 = vunpack.c.h.b16 %v412
    %v673 = vunpack.c.l.b16 %v413
    %v674 = vunpack.c.h.b16 %v413
    %v675 = vunpack.c.l.b16 %v414
    %v676 = vunpack.c.h.b16 %v414
    %v677 = vunpack.c.l.b16 %v415
    %v678 = vunpack.c.h.b16 %v415
    %v679 = vunpack.c.l.b16 %v416
    %v680 = vunpack.c.h.b16 %v416
    %v681 = vunpack.c.l.b16 %v417
    %v682 = vunpack.c.h.b16 %v417
    %v683 = vunpack.c.l.b16 %v418
    %v684 = vunpack.c.h.b16 %v418
    %v685 = vunpack.c.l.b16 %v419
    %v686 = vunpack.c.h.b16 %v419
    %v687 = vunpack.c.l.b16 %v420
    %v688 = vunpack.c.h.b16 %v420
    %v689 = vunpack.c.l.b16 %v421
    %v690 = vunpack.c.h.b16 %v421
    %v691 = vunpack.c.l.b16 %v422
    %v692 = vunpack.c.h.b16 %v422
    %v693 = vunpack.c.l.b16 %v423
    %v694 = vunpack.c.h.b16 %v423
    %v695 = vunpack.c.l.b16 %v424
    %v696 = vunpack.c.h.b16 %v424
    %v697 = vunpack.c.l.b16 %v425
    %v698 = vunpack.c.h.b16 %v425
    %v699 = vunpack.c.l.b16 %v426
    %v700 = vunpack.c.h.b16 %v426
    %v701 = vunpack.c.l.b16 %v427
    %v702 = vunpack.c.h.b16 %v427
    %v703 = vunpack.c.l.b16 %v428
    %v704 = vunpack.c.h.b16 %v428
    %v705 = vunpack.c.l.b16 %v429
    %v706 = vunpack.c.h.b16 %v429
    %v707 = vunpack.c.l.b16 %v430
    %v708 = vunpack.c.h.b16 %v430
    %v709 = vunpack.c.l.b16 %v431
    %v710 = vunpack.c.h.b16 %v431
    %v711 = vunpack.c.l.b16 %v432
    %v712 = vunpack.c.h.b16 %v432
    %v713 = vunpack.c.l.b16 %v433
    %v714 = vunpack.c.h.b16 %v433
    %v715 = vunpack.c.l.b16 %v434
    %v716 = vunpack.c.h.b16 %v434
    %v717 = vunpack.c.l.b16 %v435
    %v718 = vunpack.c.h.b16 %v435
    %v719 = vunpack.c.l.b16 %v436
    %v720 = vunpack.c.h.b16 %v436
    %v721 = vunpack.c.l.b16 %v437
    %v722 = vunpack.c.h.b16 %v437
    %v723 = vunpack.c.l.b16 %v438
    %v724 = vunpack.c.h.b16 %v438
    %v725 = vunpack.c.l.b16 %v439
    %v726 = vunpack.c.h.b16 %v439
    %v727 = vunpack.c.l.b16 %v440
    %v728 = vunpack.c.h.b16 %v440
    %v729 = vunpack.c.l.b16 %v441
    %v730 = vunpack.c.h.b16 %v441
    %v731 = vunpack.c.l.b16 %v442
    %v732 = vunpack.c.h.b16 %v442
    %v733 = vunpack.c.l.b16 %v443
    %v734 = vunpack.c.h.b16 %v443
    %v735 = vunpack.c.l.b16 %v444
    %v736 = vunpack.c.h.b16 %v444
    %v737 = vunpack.c.l.b16 %v445
    %v738 = vunpack.c.h.b16 %v445
    %v739 = vunpack.c.l.b16 %v446
    %v740 = vunpack.c.h.b16 %v446
    %v741 = vunpack.c.l.b16 %v447
    %v742 = vunpack.c.h.b16 %v447
    %v743 = vunpack.c.l.b16 %v448
    %v744 = vunpack.c.h.b16 %v448
    %v745 = vunpack.c.l.b16 %v449
    %v746 = vunpack.c.h.b16 %v449
    %v747 = vunpack.c.l.b16 %v450
    %v748 = vunpack.c.h.b16 %v450
    %v749 = vunpack.c.l.b16 %v451
    %v750 = vunpack.c.h.b16 %v451
    %v751 = vunpack.c.l.b16 %v452
    %v752 = vunpack.c.h.b16 %v452
    %v753 = vunpack.c.l.b16 %v453
    %v754 = vunpack.c.h.b16 %v453
    %v755 = vunpack.c.l.b16 %v454
    %v756 = vunpack.c.h.b16 %v454
    %v757 = vunpack.c.l.b16 %v455
    %v758 = vunpack.c.h.b16 %v455
    %v759 = vunpack.c.l.b16 %v456
    %v760 = vunpack.c.h.b16 %v456
    %v761 = vunpack.c.l.b16 %v457
    %v762 = vunpack.c.h.b16 %v457
    %v763 = vunpack.c.l.b16 %v458
    %v764 = vunpack.c.h.b16 %v458
    %v765 = vunpack.c.l.b16 %v459
    %v766 = vunpack.c.h.b16 %v459
    %v767 = vunpack.c.l.b16 %v460
    %v768 = vunpack.c.h.b16 %v460
    %v769 = vunpack.c.l.b16 %v461
    %v770 = vunpack.c.h.b16 %v461
    %v771 = vunpack.c.l.b16 %v462
    %v772 = vunpack.c.h.b16 %v462
    %v773 = vunpack.c.l.b16 %v463
    %v774 = vunpack.c.h.b16 %v463
    %v775 = vunpack.c.l.b16 %v464
    %v776 = vunpack.c.h.b16 %v464
    %v777 = vunpack.c.l.b16 %v465
    %v778 = vunpack.c.h.b16 %v465
    %v779 = vunpack.c.l.b16 %v466
    %v780 = vunpack.c.h.b16 %v466
    %v781 = vunpack.c.l.b16 %v467
    %v782 = vunpack.c.h.b16 %v467
    %v783 = vunpack.c.l.b16 %v468
    %v784 = vunpack.c.h.b16 %v468
    %v785 = vunpack.c.l.b16 %v469
    %v786 = vunpack.c.h.b16 %v469
    %v787 = vunpack.c.l.b16 %v470
    %v788 = vunpack.c.h.b16 %v470
    %v789 = vunpack.c.l.b16 %v471
    %v790 = vunpack.c.h.b16 %v471
    %v791 = vpack.c.b16 %v605, %v599
    %v792 = vpack.c.b16 %v606, %v600
    %v793 = vpack.c.b16 %v607, %v601
    %v794 = vpack.c.b16 %v608, %v602
    %v795 = vpack.c.b16 %v609, %v603
    %v796 = vpack.c.b16 %v610, %v604
    %v797 = vpack.c.b16 %v617, %v611
    %v798 = vpack.c.b16 %v618, %v612
    %v799 = vpack.c.b16 %v619, %v613
    %v800 = vpack.c.b16 %v620, %v614
    %v801 = vpack.c.b16 %v621, %v615
    %v802 = vpack.c.b16 %v622, %v616
    %v803 = vpack.c.b16 %v629, %v623
    %v804 = vpack.c.b16 %v630, %v624
    %v805 = vpack.c.b16 %v631, %v625
    %v806 = vpack.c.b16 %v632, %v626
    %v807 = vpack.c.b16 %v633, %v627
    %v808 = vpack.c.b16 %v634, %v628
    %v809 = vpack.c.b16 %v641, %v635
    %v810 = vpack.c.b16 %v642, %v636
    %v811 = vpack.c.b16 %v643, %v637
    %v812 = vpack.c.b16 %v644, %v638
    %v813 = vpack.c.b16 %v645, %v639
    %v814 = vpack.c.b16 %v646, %v640
    %v815 = vpack.c.b16 %v653, %v647
    %v816 = vpack.c.b16 %v654, %v648
    %v817 = vpack.c.b16 %v655, %v649
    %v818 = vpack.c.b16 %v656, %v650
    %v819 = vpack.c.b16 %v657, %v651
    %v820 = vpack.c.b16 %v658, %v652
    %v821 = vpack.c.b16 %v665, %v659
    %v822 = vpack.c.b16 %v666, %v660
    %v823 = vpack.c.b16 %v667, %v661
    %v824 = vpack.c.b16 %v668, %v662
    %v825 = vpack.c.b16 %v669, %v663
    %v826 = vpack.c.b16 %v670, %v664
    %v827 = vpack.c.b16 %v677, %v671
    %v828 = vpack.c.b16 %v678, %v672
    %v829 = vpack.c.b16 %v679, %v673
    %v830 = vpack.c.b16 %v680, %v674
    %v831 = vpack.c.b16 %v681, %v675
    %v832 = vpack.c.b16 %v682, %v676
    %v833 = vpack.c.b16 %v689, %v683
    %v834 = vpack.c.b16 %v690, %v684
    %v835 = vpack.c.b16 %v691, %v685
    %v836 = vpack.c.b16 %v692, %v686
    %v837 = vpack.c.b16 %v693, %v687
    %v838 = vpack.c.b16 %v694, %v688
    %v839 = vpack.c.b16 %v701, %v695
    %v840 = vpack.c.b16 %v702, %v696
    %v841 = vpack.c.b16 %v703, %v697
    %v842 = vpack.c.b16 %v704, %v698
    %v843 = vpack.c.b16 %v705, %v699
    %v844 = vpack.c.b16 %v706, %v700
    %v845 = vpack.c.b16 %v713, %v707
    %v846 = vpack.c.b16 %v714, %v708
    %v847 = vpack.c.b16 %v715, %v709
    %v848 = vpack.c.b16 %v716, %v710
    %v849 = vpack.c.b16 %v717, %v711
    %v850 = vpack.c.b16 %v718, %v712
    %v851 = vpack.c.b16 %v725, %v719
    %v852 = vpack.c.b16 %v726, %v720
    %v853 = vpack.c.b16 %v727, %v721
    %v854 = vpack.c.b16 %v728, %v722
    %v855 = vpack.c.b16 %v729, %v723
    %v856 = vpack.c.b16 %v730, %v724
    %v857 = vpack.c.b16 %v737, %v731
    %v858 = vpack.c.b16 %v738, %v732
    %v859 = vpack.c.b16 %v739, %v733
    %v860 = vpack.c.b16 %v740, %v734
    %v861 = vpack.c.b16 %v741, %v735
    %v862 = vpack.c.b16 %v742, %v736
    %v863 = vpack.c.b16 %v749, %v743
    %v864 = vpack.c.b16 %v750, %v744
    %v865 = vpack.c.b16 %v751, %v745
    %v866 = vpack.c.b16 %v752, %v746
    %v867 = vpack.c.b16 %v753, %v747
    %v868 = vpack.c.b16 %v754, %v748
    %v869 = vpack.c.b16 %v761, %v755
    %v870 = vpack.c.b16 %v762, %v756
    %v871 = vpack.c.b16 %v763, %v757
    %v872 = vpack.c.b16 %v764, %v758
    %v873 = vpack.c.b16 %v765, %v759
    %v874 = vpack.c.b16 %v766, %v760
    %v875 = vpack.c.b16 %v773, %v767
    %v876 = vpack.c.b16 %v774, %v768
    %v877 = vpack.c.b16 %v775, %v769
    %v878 = vpack.c.b16 %v776, %v770
    %v879 = vpack.c.b16 %v777, %v771
    %v880 = vpack.c.b16 %v778, %v772
    %v881 = vpack.c.b16 %v785, %v779
    %v882 = vpack.c.b16 %v786, %v780
    %v883 = vpack.c.b16 %v787, %v781
    %v884 = vpack.c.b16 %v788, %v782
    %v885 = vpack.c.b16 %v789, %v783
    %v886 = vpack.c.b16 %v790, %v784
    %983 = vmatprep.subr.bf16.mxu0 %v792
    %984 = vmatpush1.bf16.msra.mxu0 %v791
    %985 = vmatprep.subr.bf16.mxu0 %v798
    %986 = vmatpush1.bf16.msra.mxu0 %v797
    %987 = vmatprep.subr.bf16.mxu0 %v804
    %988 = vmatpush1.bf16.msra.mxu0 %v803
    %989 = vmatprep.subr.bf16.mxu0 %v810
    %990 = vmatpush1.bf16.msra.mxu0 %v809
    %991 = vmatprep.subr.bf16.mxu0 %v816
    %992 = vmatpush1.bf16.msra.mxu0 %v815
    %993 = vmatprep.subr.bf16.mxu0 %v822
    %994 = vmatpush1.bf16.msra.mxu0 %v821
    %995 = vmatprep.subr.bf16.mxu0 %v828
    %996 = vmatpush1.bf16.msra.mxu0 %v827
    %997 = vmatprep.subr.bf16.mxu0 %v834
    %998 = vmatpush1.bf16.msra.mxu0 %v833
    %999 = vmatprep.subr.bf16.mxu0 %v840
    %1000 = vmatpush1.bf16.msra.mxu0 %v839
    %1001 = vmatprep.subr.bf16.mxu0 %v846
    %1002 = vmatpush1.bf16.msra.mxu0 %v845
    %1003 = vmatprep.subr.bf16.mxu0 %v852
    %1004 = vmatpush1.bf16.msra.mxu0 %v851
    %1005 = vmatprep.subr.bf16.mxu0 %v858
    %1006 = vmatpush1.bf16.msra.mxu0 %v857
    %1007 = vmatprep.subr.bf16.mxu0 %v864
    %1008 = vmatpush1.bf16.msra.mxu0 %v863
    %1009 = vmatprep.subr.bf16.mxu0 %v870
    %1010 = vmatpush1.bf16.msra.mxu0 %v869
    %1011 = vmatprep.subr.bf16.mxu0 %v876
    %1012 = vmatpush1.bf16.msra.mxu0 %v875
    %1013 = vmatprep.subr.bf16.mxu0 %v882
    %1014 = vmatpush1.bf16.msra.mxu0 %v881
    %1015 = vmatprep.mubr.bf16.mxu0 %v375
    %1016 = vmatmul.mubr.bf16.gmra.mrb[0].mxu0 %v374
    %v1017 = vpop.f32.mrb[0].mxu0
    %v1018 = vadd.f32 %v476, %v1017
    %v1019 = vpop.f32.mrb[0].mxu0
    %v1020 = vadd.f32 %v480, %v1019
    %v1021 = vpop.f32.mrb[0].mxu0
    %v1022 = vpop.f32.mrb[0].mxu0
    %1023 = vdwg.mxu0
    %1024 = vmatprep.subr.bf16.mxu0 %v794
    %1025 = vmatpush1.bf16.msra.mxu0 %v793
    %1026 = vmatprep.subr.bf16.mxu0 %v800
    %1027 = vmatpush1.bf16.msra.mxu0 %v799
    %1028 = vmatprep.subr.bf16.mxu0 %v806
    %1029 = vmatpush1.bf16.msra.mxu0 %v805
    %1030 = vmatprep.subr.bf16.mxu0 %v812
    %1031 = vmatpush1.bf16.msra.mxu0 %v811
    %1032 = vmatprep.subr.bf16.mxu0 %v818
    %1033 = vmatpush1.bf16.msra.mxu0 %v817
    %1034 = vmatprep.subr.bf16.mxu0 %v824
    %1035 = vmatpush1.bf16.msra.mxu0 %v823
    %1036 = vmatprep.subr.bf16.mxu0 %v830
    %1037 = vmatpush1.bf16.msra.mxu0 %v829
    %1038 = vmatprep.subr.bf16.mxu0 %v836
    %1039 = vmatpush1.bf16.msra.mxu0 %v835
    %1040 = vmatprep.subr.bf16.mxu0 %v842
    %1041 = vmatpush1.bf16.msra.mxu0 %v841
    %1042 = vmatprep.subr.bf16.mxu0 %v848
    %1043 = vmatpush1.bf16.msra.mxu0 %v847
    %1044 = vmatprep.subr.bf16.mxu0 %v854
    %1045 = vmatpush1.bf16.msra.mxu0 %v853
    %1046 = vmatprep.subr.bf16.mxu0 %v860
    %1047 = vmatpush1.bf16.msra.mxu0 %v859
    %1048 = vmatprep.subr.bf16.mxu0 %v866
    %1049 = vmatpush1.bf16.msra.mxu0 %v865
    %1050 = vmatprep.subr.bf16.mxu0 %v872
    %1051 = vmatpush1.bf16.msra.mxu0 %v871
    %1052 = vmatprep.subr.bf16.mxu0 %v878
    %1053 = vmatpush1.bf16.msra.mxu0 %v877
    %1054 = vmatprep.subr.bf16.mxu0 %v884
    %1055 = vmatpush1.bf16.msra.mxu0 %v883
    %1056 = vmatprep.mubr.bf16.mxu0 %v375
    %1057 = vmatmul.mubr.bf16.gmra.mrb[0].mxu0 %v374
    %v1058 = vpop.f32.mrb[0].mxu0
    %v1059 = vadd.f32 %v484, %v1058
    %v1060 = vpop.f32.mrb[0].mxu0
    %v1061 = vadd.f32 %v488, %v1060
    %v1062 = vpop.f32.mrb[0].mxu0
    %v1063 = vpop.f32.mrb[0].mxu0
    %1064 = vdwg.mxu0
    %1065 = vmatprep.subr.bf16.mxu0 %v796
    %1066 = vmatpush1.bf16.msra.mxu0 %v795
    %1067 = vmatprep.subr.bf16.mxu0 %v802
    %1068 = vmatpush1.bf16.msra.mxu0 %v801
    %1069 = vmatprep.subr.bf16.mxu0 %v808
    %1070 = vmatpush1.bf16.msra.mxu0 %v807
    %1071 = vmatprep.subr.bf16.mxu0 %v814
    %1072 = vmatpush1.bf16.msra.mxu0 %v813
    %1073 = vmatprep.subr.bf16.mxu0 %v820
    %1074 = vmatpush1.bf16.msra.mxu0 %v819
    %1075 = vmatprep.subr.bf16.mxu0 %v826
    %1076 = vmatpush1.bf16.msra.mxu0 %v825
    %1077 = vmatprep.subr.bf16.mxu0 %v832
    %1078 = vmatpush1.bf16.msra.mxu0 %v831
    %1079 = vmatprep.subr.bf16.mxu0 %v838
    %1080 = vmatpush1.bf16.msra.mxu0 %v837
    %1081 = vmatprep.subr.bf16.mxu0 %v844
    %1082 = vmatpush1.bf16.msra.mxu0 %v843
    %1083 = vmatprep.subr.bf16.mxu0 %v850
    %1084 = vmatpush1.bf16.msra.mxu0 %v849
    %1085 = vmatprep.subr.bf16.mxu0 %v856
    %1086 = vmatpush1.bf16.msra.mxu0 %v855
    %1087 = vmatprep.subr.bf16.mxu0 %v862
    %1088 = vmatpush1.bf16.msra.mxu0 %v861
    %1089 = vmatprep.subr.bf16.mxu0 %v868
    %1090 = vmatpush1.bf16.msra.mxu0 %v867
    %1091 = vmatprep.subr.bf16.mxu0 %v874
    %1092 = vmatpush1.bf16.msra.mxu0 %v873
    %1093 = vmatprep.subr.bf16.mxu0 %v880
    %1094 = vmatpush1.bf16.msra.mxu0 %v879
    %1095 = vmatprep.subr.bf16.mxu0 %v886
    %1096 = vmatpush1.bf16.msra.mxu0 %v885
    %1097 = vmatprep.mubr.bf16.mxu0 %v375
    %1098 = vmatmul.mubr.bf16.gmra.mrb[0].mxu0 %v374
    %v1099 = vpop.f32.mrb[0].mxu0
    %v1100 = vadd.f32 %v492, %v1099
    %v1101 = vpop.f32.mrb[0].mxu0
    %v1102 = vadd.f32 %v496, %v1101
    %v1103 = vpop.f32.mrb[0].mxu0
    %v1104 = vpop.f32.mrb[0].mxu0
    %1105 = vdwg.mxu0
    %v1106 = vtanh.pop %v1018
    %v1107 = vtanh.pop %v1020
    %v1108 = vmul.f32 %v1106, 0.5
    %v1109 = vmul.f32 %v1107, 0.5
    %v1110 = vadd.f32 %v1108, 0.5
    %v1111 = vadd.f32 %v1109, 0.5
    %v1112 = vtanh.pop %v1059
    %v1113 = vtanh.pop %v1061
    %v1114 = vtanh.pop %v1100
    %v1115 = vtanh.pop %v1102
    %v1116 = vmul.f32 %v1114, 0.5
    %v1117 = vmul.f32 %v1115, 0.5
    %v1118 = vadd.f32 %v1116, 0.5
    %v1119 = vadd.f32 %v1117, 0.5
    %v1120 = vmul.f32 %v1110, %v1112
    %v1121 = vmul.f32 %v1111, %v1113
    %v1122 = vtanh.pop %v1120
    %v1123 = vtanh.pop %v1121
    %v1124 = vmul.f32 %v1118, %v1122
    %v1125 = vmul.f32 %v1119, %v1123
    %v1126 = vpack.c.bf16 %v1124, %v1124
    %v1127 = vpack.c.bf16 %v1125, %v1125
    %v1128 = vld [vmem:[#allocation8] sm:$0xff]
    %v1129 = vld [vmem:[#allocation8 + $0x8] sm:$0xff]
    %v1130 = vld [vmem:[#allocation8 + $0x10] sm:$0xff]
    %v1131 = vld [vmem:[#allocation8 + $0x18] sm:$0xff]
    %v1132 = vld [vmem:[#allocation8 + $0x20] sm:$0xff]
    %v1133 = vld [vmem:[#allocation8 + $0x28] sm:$0xff]
    %v1134 = vld [vmem:[#allocation8 + $0x30] sm:$0xff]
    %v1135 = vld [vmem:[#allocation8 + $0x38] sm:$0xff]
    %v1136 = vld [vmem:[#allocation8 + $0x40] sm:$0xff]
    %v1137 = vld [vmem:[#allocation8 + $0x48] sm:$0xff]
    %v1138 = vld [vmem:[#allocation8 + $0x50] sm:$0xff]
    %v1139 = vld [vmem:[#allocation8 + $0x58] sm:$0xff]
    %v1140 = vld [vmem:[#allocation8 + $0x60] sm:$0xff]
    %v1141 = vld [vmem:[#allocation8 + $0x68] sm:$0xff]
    %v1142 = vld [vmem:[#allocation8 + $0x70] sm:$0xff]
    %v1143 = vld [vmem:[#allocation8 + $0x78] sm:$0xff]
    %v1144 = vld [vmem:[#allocation8 + $0x80] sm:$0xff]
    %v1145 = vld [vmem:[#allocation8 + $0x88] sm:$0xff]
    %v1146 = vld [vmem:[#allocation8 + $0x90] sm:$0xff]
    %v1147 = vld [vmem:[#allocation8 + $0x98] sm:$0xff]
    %v1148 = vld [vmem:[#allocation8 + $0xa0] sm:$0xff]
    %v1149 = vld [vmem:[#allocation8 + $0xa8] sm:$0xff]
    %v1150 = vld [vmem:[#allocation8 + $0xb0] sm:$0xff]
    %v1151 = vld [vmem:[#allocation8 + $0xb8] sm:$0xff]
    %v1152 = vld [vmem:[#allocation8 + $0xc0] sm:$0xff]
    %v1153 = vld [vmem:[#allocation8 + $0xc8] sm:$0xff]
    %v1154 = vld [vmem:[#allocation8 + $0xd0] sm:$0xff]
    %v1155 = vld [vmem:[#allocation8 + $0xd8] sm:$0xff]
    %v1156 = vld [vmem:[#allocation8 + $0xe0] sm:$0xff]
    %v1157 = vld [vmem:[#allocation8 + $0xe8] sm:$0xff]
    %v1158 = vld [vmem:[#allocation8 + $0xf0] sm:$0xff]
    %v1159 = vld [vmem:[#allocation8 + $0xf8] sm:$0xff]
    %v1160 = vld [vmem:[#allocation8 + $0x100] sm:$0xff]
    %v1161 = vld [vmem:[#allocation8 + $0x108] sm:$0xff]
    %v1162 = vld [vmem:[#allocation8 + $0x110] sm:$0xff]
    %v1163 = vld [vmem:[#allocation8 + $0x118] sm:$0xff]
    %v1164 = vld [vmem:[#allocation8 + $0x120] sm:$0xff]
    %v1165 = vld [vmem:[#allocation8 + $0x128] sm:$0xff]
    %v1166 = vld [vmem:[#allocation8 + $0x130] sm:$0xff]
    %v1167 = vld [vmem:[#allocation8 + $0x138] sm:$0xff]
    %v1168 = vld [vmem:[#allocation8 + $0x140] sm:$0xff]
    %v1169 = vld [vmem:[#allocation8 + $0x148] sm:$0xff]
    %v1170 = vld [vmem:[#allocation8 + $0x150] sm:$0xff]
    %v1171 = vld [vmem:[#allocation8 + $0x158] sm:$0xff]
    %v1172 = vld [vmem:[#allocation8 + $0x160] sm:$0xff]
    %v1173 = vld [vmem:[#allocation8 + $0x168] sm:$0xff]
    %v1174 = vld [vmem:[#allocation8 + $0x170] sm:$0xff]
    %v1175 = vld [vmem:[#allocation8 + $0x178] sm:$0xff]
    %v1176 = vld [vmem:[#allocation8 + $0x180] sm:$0xff]
    %v1177 = vld [vmem:[#allocation8 + $0x188] sm:$0xff]
    %v1178 = vld [vmem:[#allocation8 + $0x190] sm:$0xff]
    %v1179 = vld [vmem:[#allocation8 + $0x198] sm:$0xff]
    %v1180 = vld [vmem:[#allocation8 + $0x1a0] sm:$0xff]
    %v1181 = vld [vmem:[#allocation8 + $0x1a8] sm:$0xff]
    %v1182 = vld [vmem:[#allocation8 + $0x1b0] sm:$0xff]
    %v1183 = vld [vmem:[#allocation8 + $0x1b8] sm:$0xff]
    %v1184 = vld [vmem:[#allocation8 + $0x1c0] sm:$0xff]
    %v1185 = vld [vmem:[#allocation8 + $0x1c8] sm:$0xff]
    %v1186 = vld [vmem:[#allocation8 + $0x1d0] sm:$0xff]
    %v1187 = vld [vmem:[#allocation8 + $0x1d8] sm:$0xff]
    %v1188 = vld [vmem:[#allocation8 + $0x1e0] sm:$0xff]
    %v1189 = vld [vmem:[#allocation8 + $0x1e8] sm:$0xff]
    %v1190 = vld [vmem:[#allocation8 + $0x1f0] sm:$0xff]
    %v1191 = vld [vmem:[#allocation8 + $0x1f8] sm:$0xff]
    %v1193 = vlaneseq
    %v1194 = vshrl.u32 %v1193, 7
    %v1195 = vsub.s32 0, %v1194
    %v1196 = vrot.slane %v111, %v1195
    %v1197 = vlaneseq
    %v1198 = vshrl.u32 %v1197, 7
    %v1199 = vsub.s32 1, %v1198
    %v1200 = vrot.slane %v111, %v1199
    %v1201 = vlaneseq
    %v1202 = vshrl.u32 %v1201, 7
    %v1203 = vsub.s32 2, %v1202
    %v1204 = vrot.slane %v111, %v1203
    %v1205 = vlaneseq
    %v1206 = vshrl.u32 %v1205, 7
    %v1207 = vsub.s32 3, %v1206
    %v1208 = vrot.slane %v111, %v1207
    %v1277 = vunpack.c.l.b16 %v1128
    %v1278 = vunpack.c.h.b16 %v1128
    %v1279 = vunpack.c.l.b16 %v1129
    %v1280 = vunpack.c.h.b16 %v1129
    %v1281 = vunpack.c.l.b16 %v1130
    %v1282 = vunpack.c.h.b16 %v1130
    %v1283 = vunpack.c.l.b16 %v1131
    %v1284 = vunpack.c.h.b16 %v1131
    %v1285 = vunpack.c.l.b16 %v1132
    %v1286 = vunpack.c.h.b16 %v1132
    %v1287 = vunpack.c.l.b16 %v1133
    %v1288 = vunpack.c.h.b16 %v1133
    %v1289 = vunpack.c.l.b16 %v1134
    %v1290 = vunpack.c.h.b16 %v1134
    %v1291 = vunpack.c.l.b16 %v1135
    %v1292 = vunpack.c.h.b16 %v1135
    %v1293 = vunpack.c.l.b16 %v1136
    %v1294 = vunpack.c.h.b16 %v1136
    %v1295 = vunpack.c.l.b16 %v1137
    %v1296 = vunpack.c.h.b16 %v1137
    %v1297 = vunpack.c.l.b16 %v1138
    %v1298 = vunpack.c.h.b16 %v1138
    %v1299 = vunpack.c.l.b16 %v1139
    %v1300 = vunpack.c.h.b16 %v1139
    %v1301 = vunpack.c.l.b16 %v1140
    %v1302 = vunpack.c.h.b16 %v1140
    %v1303 = vunpack.c.l.b16 %v1141
    %v1304 = vunpack.c.h.b16 %v1141
    %v1305 = vunpack.c.l.b16 %v1142
    %v1306 = vunpack.c.h.b16 %v1142
    %v1307 = vunpack.c.l.b16 %v1143
    %v1308 = vunpack.c.h.b16 %v1143
    %v1309 = vunpack.c.l.b16 %v1144
    %v1310 = vunpack.c.h.b16 %v1144
    %v1311 = vunpack.c.l.b16 %v1145
    %v1312 = vunpack.c.h.b16 %v1145
    %v1313 = vunpack.c.l.b16 %v1146
    %v1314 = vunpack.c.h.b16 %v1146
    %v1315 = vunpack.c.l.b16 %v1147
    %v1316 = vunpack.c.h.b16 %v1147
    %v1317 = vunpack.c.l.b16 %v1148
    %v1318 = vunpack.c.h.b16 %v1148
    %v1319 = vunpack.c.l.b16 %v1149
    %v1320 = vunpack.c.h.b16 %v1149
    %v1321 = vunpack.c.l.b16 %v1150
    %v1322 = vunpack.c.h.b16 %v1150
    %v1323 = vunpack.c.l.b16 %v1151
    %v1324 = vunpack.c.h.b16 %v1151
    %v1325 = vunpack.c.l.b16 %v1152
    %v1326 = vunpack.c.h.b16 %v1152
    %v1327 = vunpack.c.l.b16 %v1153
    %v1328 = vunpack.c.h.b16 %v1153
    %v1329 = vunpack.c.l.b16 %v1154
    %v1330 = vunpack.c.h.b16 %v1154
    %v1331 = vunpack.c.l.b16 %v1155
    %v1332 = vunpack.c.h.b16 %v1155
    %v1333 = vunpack.c.l.b16 %v1156
    %v1334 = vunpack.c.h.b16 %v1156
    %v1335 = vunpack.c.l.b16 %v1157
    %v1336 = vunpack.c.h.b16 %v1157
    %v1337 = vunpack.c.l.b16 %v1158
    %v1338 = vunpack.c.h.b16 %v1158
    %v1339 = vunpack.c.l.b16 %v1159
    %v1340 = vunpack.c.h.b16 %v1159
    %v1341 = vunpack.c.l.b16 %v1160
    %v1342 = vunpack.c.h.b16 %v1160
    %v1343 = vunpack.c.l.b16 %v1161
    %v1344 = vunpack.c.h.b16 %v1161
    %v1345 = vunpack.c.l.b16 %v1162
    %v1346 = vunpack.c.h.b16 %v1162
    %v1347 = vunpack.c.l.b16 %v1163
    %v1348 = vunpack.c.h.b16 %v1163
    %v1349 = vunpack.c.l.b16 %v1164
    %v1350 = vunpack.c.h.b16 %v1164
    %v1351 = vunpack.c.l.b16 %v1165
    %v1352 = vunpack.c.h.b16 %v1165
    %v1353 = vunpack.c.l.b16 %v1166
    %v1354 = vunpack.c.h.b16 %v1166
    %v1355 = vunpack.c.l.b16 %v1167
    %v1356 = vunpack.c.h.b16 %v1167
    %v1357 = vunpack.c.l.b16 %v1168
    %v1358 = vunpack.c.h.b16 %v1168
    %v1359 = vunpack.c.l.b16 %v1169
    %v1360 = vunpack.c.h.b16 %v1169
    %v1361 = vunpack.c.l.b16 %v1170
    %v1362 = vunpack.c.h.b16 %v1170
    %v1363 = vunpack.c.l.b16 %v1171
    %v1364 = vunpack.c.h.b16 %v1171
    %v1365 = vunpack.c.l.b16 %v1172
    %v1366 = vunpack.c.h.b16 %v1172
    %v1367 = vunpack.c.l.b16 %v1173
    %v1368 = vunpack.c.h.b16 %v1173
    %v1369 = vunpack.c.l.b16 %v1174
    %v1370 = vunpack.c.h.b16 %v1174
    %v1371 = vunpack.c.l.b16 %v1175
    %v1372 = vunpack.c.h.b16 %v1175
    %v1373 = vunpack.c.l.b16 %v1176
    %v1374 = vunpack.c.h.b16 %v1176
    %v1375 = vunpack.c.l.b16 %v1177
    %v1376 = vunpack.c.h.b16 %v1177
    %v1377 = vunpack.c.l.b16 %v1178
    %v1378 = vunpack.c.h.b16 %v1178
    %v1379 = vunpack.c.l.b16 %v1179
    %v1380 = vunpack.c.h.b16 %v1179
    %v1381 = vunpack.c.l.b16 %v1180
    %v1382 = vunpack.c.h.b16 %v1180
    %v1383 = vunpack.c.l.b16 %v1181
    %v1384 = vunpack.c.h.b16 %v1181
    %v1385 = vunpack.c.l.b16 %v1182
    %v1386 = vunpack.c.h.b16 %v1182
    %v1387 = vunpack.c.l.b16 %v1183
    %v1388 = vunpack.c.h.b16 %v1183
    %v1389 = vunpack.c.l.b16 %v1184
    %v1390 = vunpack.c.h.b16 %v1184
    %v1391 = vunpack.c.l.b16 %v1185
    %v1392 = vunpack.c.h.b16 %v1185
    %v1393 = vunpack.c.l.b16 %v1186
    %v1394 = vunpack.c.h.b16 %v1186
    %v1395 = vunpack.c.l.b16 %v1187
    %v1396 = vunpack.c.h.b16 %v1187
    %v1397 = vunpack.c.l.b16 %v1188
    %v1398 = vunpack.c.h.b16 %v1188
    %v1399 = vunpack.c.l.b16 %v1189
    %v1400 = vunpack.c.h.b16 %v1189
    %v1401 = vunpack.c.l.b16 %v1190
    %v1402 = vunpack.c.h.b16 %v1190
    %v1403 = vunpack.c.l.b16 %v1191
    %v1404 = vunpack.c.h.b16 %v1191
    %v1405 = vpack.c.b16 %v1281, %v1277
    %v1406 = vpack.c.b16 %v1282, %v1278
    %v1407 = vpack.c.b16 %v1283, %v1279
    %v1408 = vpack.c.b16 %v1284, %v1280
    %v1409 = vpack.c.b16 %v1289, %v1285
    %v1410 = vpack.c.b16 %v1290, %v1286
    %v1411 = vpack.c.b16 %v1291, %v1287
    %v1412 = vpack.c.b16 %v1292, %v1288
    %v1413 = vpack.c.b16 %v1297, %v1293
    %v1414 = vpack.c.b16 %v1298, %v1294
    %v1415 = vpack.c.b16 %v1299, %v1295
    %v1416 = vpack.c.b16 %v1300, %v1296
    %v1417 = vpack.c.b16 %v1305, %v1301
    %v1418 = vpack.c.b16 %v1306, %v1302
    %v1419 = vpack.c.b16 %v1307, %v1303
    %v1420 = vpack.c.b16 %v1308, %v1304
    %v1421 = vpack.c.b16 %v1313, %v1309
    %v1422 = vpack.c.b16 %v1314, %v1310
    %v1423 = vpack.c.b16 %v1315, %v1311
    %v1424 = vpack.c.b16 %v1316, %v1312
    %v1425 = vpack.c.b16 %v1321, %v1317
    %v1426 = vpack.c.b16 %v1322, %v1318
    %v1427 = vpack.c.b16 %v1323, %v1319
    %v1428 = vpack.c.b16 %v1324, %v1320
    %v1429 = vpack.c.b16 %v1329, %v1325
    %v1430 = vpack.c.b16 %v1330, %v1326
    %v1431 = vpack.c.b16 %v1331, %v1327
    %v1432 = vpack.c.b16 %v1332, %v1328
    %v1433 = vpack.c.b16 %v1337, %v1333
    %v1434 = vpack.c.b16 %v1338, %v1334
    %v1435 = vpack.c.b16 %v1339, %v1335
    %v1436 = vpack.c.b16 %v1340, %v1336
    %v1437 = vpack.c.b16 %v1345, %v1341
    %v1438 = vpack.c.b16 %v1346, %v1342
    %v1439 = vpack.c.b16 %v1347, %v1343
    %v1440 = vpack.c.b16 %v1348, %v1344
    %v1441 = vpack.c.b16 %v1353, %v1349
    %v1442 = vpack.c.b16 %v1354, %v1350
    %v1443 = vpack.c.b16 %v1355, %v1351
    %v1444 = vpack.c.b16 %v1356, %v1352
    %v1445 = vpack.c.b16 %v1361, %v1357
    %v1446 = vpack.c.b16 %v1362, %v1358
    %v1447 = vpack.c.b16 %v1363, %v1359
    %v1448 = vpack.c.b16 %v1364, %v1360
    %v1449 = vpack.c.b16 %v1369, %v1365
    %v1450 = vpack.c.b16 %v1370, %v1366
    %v1451 = vpack.c.b16 %v1371, %v1367
    %v1452 = vpack.c.b16 %v1372, %v1368
    %v1453 = vpack.c.b16 %v1377, %v1373
    %v1454 = vpack.c.b16 %v1378, %v1374
    %v1455 = vpack.c.b16 %v1379, %v1375
    %v1456 = vpack.c.b16 %v1380, %v1376
    %v1457 = vpack.c.b16 %v1385, %v1381
    %v1458 = vpack.c.b16 %v1386, %v1382
    %v1459 = vpack.c.b16 %v1387, %v1383
    %v1460 = vpack.c.b16 %v1388, %v1384
    %v1461 = vpack.c.b16 %v1393, %v1389
    %v1462 = vpack.c.b16 %v1394, %v1390
    %v1463 = vpack.c.b16 %v1395, %v1391
    %v1464 = vpack.c.b16 %v1396, %v1392
    %v1465 = vpack.c.b16 %v1401, %v1397
    %v1466 = vpack.c.b16 %v1402, %v1398
    %v1467 = vpack.c.b16 %v1403, %v1399
    %v1468 = vpack.c.b16 %v1404, %v1400
    %1533 = vmatprep.subr.bf16.mxu0 %v1406
    %1534 = vmatpush1.bf16.msra.mxu0 %v1405
    %1535 = vmatprep.subr.bf16.mxu0 %v1410
    %1536 = vmatpush1.bf16.msra.mxu0 %v1409
    %1537 = vmatprep.subr.bf16.mxu0 %v1414
    %1538 = vmatpush1.bf16.msra.mxu0 %v1413
    %1539 = vmatprep.subr.bf16.mxu0 %v1418
    %1540 = vmatpush1.bf16.msra.mxu0 %v1417
    %1541 = vmatprep.subr.bf16.mxu0 %v1422
    %1542 = vmatpush1.bf16.msra.mxu0 %v1421
    %1543 = vmatprep.subr.bf16.mxu0 %v1426
    %1544 = vmatpush1.bf16.msra.mxu0 %v1425
    %1545 = vmatprep.subr.bf16.mxu0 %v1430
    %1546 = vmatpush1.bf16.msra.mxu0 %v1429
    %1547 = vmatprep.subr.bf16.mxu0 %v1434
    %1548 = vmatpush1.bf16.msra.mxu0 %v1433
    %1549 = vmatprep.subr.bf16.mxu0 %v1438
    %1550 = vmatpush1.bf16.msra.mxu0 %v1437
    %1551 = vmatprep.subr.bf16.mxu0 %v1442
    %1552 = vmatpush1.bf16.msra.mxu0 %v1441
    %1553 = vmatprep.subr.bf16.mxu0 %v1446
    %1554 = vmatpush1.bf16.msra.mxu0 %v1445
    %1555 = vmatprep.subr.bf16.mxu0 %v1450
    %1556 = vmatpush1.bf16.msra.mxu0 %v1449
    %1557 = vmatprep.subr.bf16.mxu0 %v1454
    %1558 = vmatpush1.bf16.msra.mxu0 %v1453
    %1559 = vmatprep.subr.bf16.mxu0 %v1458
    %1560 = vmatpush1.bf16.msra.mxu0 %v1457
    %1561 = vmatprep.subr.bf16.mxu0 %v1462
    %1562 = vmatpush1.bf16.msra.mxu0 %v1461
    %1563 = vmatprep.subr.bf16.mxu0 %v1466
    %1564 = vmatpush1.bf16.msra.mxu0 %v1465
    %1565 = vmatprep.mubr.bf16.mxu0 %v1127
    %1566 = vmatmul.mubr.bf16.gmra.mrb[0].mxu0 %v1126
    %v1567 = vpop.f32.mrb[0].mxu0
    %v1568 = vadd.f32 %v1196, %v1567
    %v1569 = vpop.f32.mrb[0].mxu0
    %v1570 = vadd.f32 %v1200, %v1569
    %v1571 = vpop.f32.mrb[0].mxu0
    %v1572 = vpop.f32.mrb[0].mxu0
    %1573 = vdwg.mxu0
    %1574 = vmatprep.subr.bf16.mxu0 %v1408
    %1575 = vmatpush1.bf16.msra.mxu0 %v1407
    %1576 = vmatprep.subr.bf16.mxu0 %v1412
    %1577 = vmatpush1.bf16.msra.mxu0 %v1411
    %1578 = vmatprep.subr.bf16.mxu0 %v1416
    %1579 = vmatpush1.bf16.msra.mxu0 %v1415
    %1580 = vmatprep.subr.bf16.mxu0 %v1420
    %1581 = vmatpush1.bf16.msra.mxu0 %v1419
    %1582 = vmatprep.subr.bf16.mxu0 %v1424
    %1583 = vmatpush1.bf16.msra.mxu0 %v1423
    %1584 = vmatprep.subr.bf16.mxu0 %v1428
    %1585 = vmatpush1.bf16.msra.mxu0 %v1427
    %1586 = vmatprep.subr.bf16.mxu0 %v1432
    %1587 = vmatpush1.bf16.msra.mxu0 %v1431
    %1588 = vmatprep.subr.bf16.mxu0 %v1436
    %1589 = vmatpush1.bf16.msra.mxu0 %v1435
    %1590 = vmatprep.subr.bf16.mxu0 %v1440
    %1591 = vmatpush1.bf16.msra.mxu0 %v1439
    %1592 = vmatprep.subr.bf16.mxu0 %v1444
    %1593 = vmatpush1.bf16.msra.mxu0 %v1443
    %1594 = vmatprep.subr.bf16.mxu0 %v1448
    %1595 = vmatpush1.bf16.msra.mxu0 %v1447
    %1596 = vmatprep.subr.bf16.mxu0 %v1452
    %1597 = vmatpush1.bf16.msra.mxu0 %v1451
    %1598 = vmatprep.subr.bf16.mxu0 %v1456
    %1599 = vmatpush1.bf16.msra.mxu0 %v1455
    %1600 = vmatprep.subr.bf16.mxu0 %v1460
    %1601 = vmatpush1.bf16.msra.mxu0 %v1459
    %1602 = vmatprep.subr.bf16.mxu0 %v1464
    %1603 = vmatpush1.bf16.msra.mxu0 %v1463
    %1604 = vmatprep.subr.bf16.mxu0 %v1468
    %1605 = vmatpush1.bf16.msra.mxu0 %v1467
    %1606 = vmatprep.mubr.bf16.mxu0 %v1127
    %1607 = vmatmul.mubr.bf16.gmra.mrb[0].mxu0 %v1126
    %v1608 = vpop.f32.mrb[0].mxu0
    %v1609 = vadd.f32 %v1204, %v1608
    %v1610 = vpop.f32.mrb[0].mxu0
    %v1611 = vadd.f32 %v1208, %v1610
    %v1612 = vpop.f32.mrb[0].mxu0
    %v1613 = vpop.f32.mrb[0].mxu0
    %1614 = vdwg.mxu0
    %v1615 = vadd.f32 %v1568, %v1570
    %v1616 = vadd.f32 %v1615, %v1609
    %v1617 = vadd.f32 %v1616, %v1611
    %1618 = vadd.xlane.f32.xlu0 %v1617
    %v1619 = vpop.xlane.xlu0 %1618
    %v1620 = vmul.f32 %v1568, %v1568
    %v1621 = vmul.f32 %v1570, %v1570
    %v1622 = vmul.f32 %v1609, %v1609
    %v1623 = vmul.f32 %v1611, %v1611
    %v1624 = vadd.f32 %v1620, %v1621
    %v1625 = vadd.f32 %v1624, %v1622
    %v1626 = vadd.f32 %v1625, %v1623
    %1627 = vadd.xlane.f32.xlu0 %v1626
    %v1628 = vpop.xlane.xlu0 %1627
    %v1629 = vmul.f32 %v1619, 0.001953125
    %v1630 = vmul.f32 %v1628, 0.001953125
    %v1631 = vmul.f32 %v1629, %v1629
    %v1632 = vsub.f32 %v1630, %v1631
    %v1633 = vmax.f32 %v1632, 0.0
    %v1634 = vsub.f32 %v1568, %v1629
    %v1635 = vsub.f32 %v1570, %v1629
    %v1636 = vsub.f32 %v1609, %v1629
    %v1637 = vsub.f32 %v1611, %v1629
    %v1638 = vadd.f32 %v1633, 1e-05
    %v1639 = vrsqrt.pop %v1638
    %v1640 = vmul.f32 %v1634, %v1639
    %v1641 = vmul.f32 %v1635, %v1639
    %v1642 = vmul.f32 %v1636, %v1639
    %v1643 = vmul.f32 %v1637, %v1639
    %v1645 = vlaneseq
    %v1646 = vshrl.u32 %v1645, 7
    %v1647 = vsub.s32 0, %v1646
    %v1648 = vrot.slane %v113, %v1647
    %v1649 = vlaneseq
    %v1650 = vshrl.u32 %v1649, 7
    %v1651 = vsub.s32 1, %v1650
    %v1652 = vrot.slane %v113, %v1651
    %v1653 = vlaneseq
    %v1654 = vshrl.u32 %v1653, 7
    %v1655 = vsub.s32 2, %v1654
    %v1656 = vrot.slane %v113, %v1655
    %v1657 = vlaneseq
    %v1658 = vshrl.u32 %v1657, 7
    %v1659 = vsub.s32 3, %v1658
    %v1660 = vrot.slane %v113, %v1659
    %v1665 = vmul.f32 %v1640, %v1648
    %v1666 = vmul.f32 %v1641, %v1652
    %v1667 = vmul.f32 %v1642, %v1656
    %v1668 = vmul.f32 %v1643, %v1660
    %v1670 = vlaneseq
    %v1671 = vshrl.u32 %v1670, 7
    %v1672 = vsub.s32 0, %v1671
    %v1673 = vrot.slane %v115, %v1672
    %v1674 = vlaneseq
    %v1675 = vshrl.u32 %v1674, 7
    %v1676 = vsub.s32 1, %v1675
    %v1677 = vrot.slane %v115, %v1676
    %v1678 = vlaneseq
    %v1679 = vshrl.u32 %v1678, 7
    %v1680 = vsub.s32 2, %v1679
    %v1681 = vrot.slane %v115, %v1680
    %v1682 = vlaneseq
    %v1683 = vshrl.u32 %v1682, 7
    %v1684 = vsub.s32 3, %v1683
    %v1685 = vrot.slane %v115, %v1684
    %v1690 = vadd.f32 %v1665, %v1673
    %v1691 = vadd.f32 %v1666, %v1677
    %v1692 = vadd.f32 %v1667, %v1681
    %v1693 = vadd.f32 %v1668, %v1685
    %v1694 = vmax.f32 %v1690, 0.0
    %v1695 = vmax.f32 %v1691, 0.0
    %v1696 = vmax.f32 %v1692, 0.0
    %v1697 = vmax.f32 %v1693, 0.0
    %v1698 = vpack.c.bf16 %v1694, %v1694
    %v1699 = vpack.c.bf16 %v1695, %v1695
    %v1700 = vpack.c.bf16 %v1696, %v1696
    %v1701 = vpack.c.bf16 %v1697, %v1697
    %v1702 = vld [vmem:[#allocation10] sm:$0xff]
    %v1703 = vld [vmem:[#allocation10 + $0x8] sm:$0xff]
    %v1704 = vld [vmem:[#allocation10 + $0x10] sm:$0xff]
    %v1705 = vld [vmem:[#allocation10 + $0x18] sm:$0xff]
    %v1706 = vld [vmem:[#allocation10 + $0x20] sm:$0xff]
    %v1707 = vld [vmem:[#allocation10 + $0x28] sm:$0xff]
    %v1708 = vld [vmem:[#allocation10 + $0x30] sm:$0xff]
    %v1709 = vld [vmem:[#allocation10 + $0x38] sm:$0xff]
    %v1710 = vld [vmem:[#allocation10 + $0x40] sm:$0xff]
    %v1711 = vld [vmem:[#allocation10 + $0x48] sm:$0xff]
    %v1712 = vld [vmem:[#allocation10 + $0x50] sm:$0xff]
    %v1713 = vld [vmem:[#allocation10 + $0x58] sm:$0xff]
    %v1714 = vld [vmem:[#allocation10 + $0x60] sm:$0xff]
    %v1715 = vld [vmem:[#allocation10 + $0x68] sm:$0xff]
    %v1716 = vld [vmem:[#allocation10 + $0x70] sm:$0xff]
    %v1717 = vld [vmem:[#allocation10 + $0x78] sm:$0xff]
    %v1718 = vld [vmem:[#allocation10 + $0x80] sm:$0xff]
    %v1719 = vld [vmem:[#allocation10 + $0x88] sm:$0xff]
    %v1720 = vld [vmem:[#allocation10 + $0x90] sm:$0xff]
    %v1721 = vld [vmem:[#allocation10 + $0x98] sm:$0xff]
    %v1722 = vld [vmem:[#allocation10 + $0xa0] sm:$0xff]
    %v1723 = vld [vmem:[#allocation10 + $0xa8] sm:$0xff]
    %v1724 = vld [vmem:[#allocation10 + $0xb0] sm:$0xff]
    %v1725 = vld [vmem:[#allocation10 + $0xb8] sm:$0xff]
    %v1726 = vld [vmem:[#allocation10 + $0xc0] sm:$0xff]
    %v1727 = vld [vmem:[#allocation10 + $0xc8] sm:$0xff]
    %v1728 = vld [vmem:[#allocation10 + $0xd0] sm:$0xff]
    %v1729 = vld [vmem:[#allocation10 + $0xd8] sm:$0xff]
    %v1730 = vld [vmem:[#allocation10 + $0xe0] sm:$0xff]
    %v1731 = vld [vmem:[#allocation10 + $0xe8] sm:$0xff]
    %v1732 = vld [vmem:[#allocation10 + $0xf0] sm:$0xff]
    %v1733 = vld [vmem:[#allocation10 + $0xf8] sm:$0xff]
    %v1734 = vld [vmem:[#allocation10 + $0x100] sm:$0xff]
    %v1735 = vld [vmem:[#allocation10 + $0x108] sm:$0xff]
    %v1736 = vld [vmem:[#allocation10 + $0x110] sm:$0xff]
    %v1737 = vld [vmem:[#allocation10 + $0x118] sm:$0xff]
    %v1738 = vld [vmem:[#allocation10 + $0x120] sm:$0xff]
    %v1739 = vld [vmem:[#allocation10 + $0x128] sm:$0xff]
    %v1740 = vld [vmem:[#allocation10 + $0x130] sm:$0xff]
    %v1741 = vld [vmem:[#allocation10 + $0x138] sm:$0xff]
    %v1742 = vld [vmem:[#allocation10 + $0x140] sm:$0xff]
    %v1743 = vld [vmem:[#allocation10 + $0x148] sm:$0xff]
    %v1744 = vld [vmem:[#allocation10 + $0x150] sm:$0xff]
    %v1745 = vld [vmem:[#allocation10 + $0x158] sm:$0xff]
    %v1746 = vld [vmem:[#allocation10 + $0x160] sm:$0xff]
    %v1747 = vld [vmem:[#allocation10 + $0x168] sm:$0xff]
    %v1748 = vld [vmem:[#allocation10 + $0x170] sm:$0xff]
    %v1749 = vld [vmem:[#allocation10 + $0x178] sm:$0xff]
    %v1750 = vld [vmem:[#allocation10 + $0x180] sm:$0xff]
    %v1751 = vld [vmem:[#allocation10 + $0x188] sm:$0xff]
    %v1752 = vld [vmem:[#allocation10 + $0x190] sm:$0xff]
    %v1753 = vld [vmem:[#allocation10 + $0x198] sm:$0xff]
    %v1754 = vld [vmem:[#allocation10 + $0x1a0] sm:$0xff]
    %v1755 = vld [vmem:[#allocation10 + $0x1a8] sm:$0xff]
    %v1756 = vld [vmem:[#allocation10 + $0x1b0] sm:$0xff]
    %v1757 = vld [vmem:[#allocation10 + $0x1b8] sm:$0xff]
    %v1758 = vld [vmem:[#allocation10 + $0x1c0] sm:$0xff]
    %v1759 = vld [vmem:[#allocation10 + $0x1c8] sm:$0xff]
    %v1760 = vld [vmem:[#allocation10 + $0x1d0] sm:$0xff]
    %v1761 = vld [vmem:[#allocation10 + $0x1d8] sm:$0xff]
    %v1762 = vld [vmem:[#allocation10 + $0x1e0] sm:$0xff]
    %v1763 = vld [vmem:[#allocation10 + $0x1e8] sm:$0xff]
    %v1764 = vld [vmem:[#allocation10 + $0x1f0] sm:$0xff]
    %v1765 = vld [vmem:[#allocation10 + $0x1f8] sm:$0xff]
    %v1767 = vlaneseq
    %v1768 = vshrl.u32 %v1767, 7
    %v1769 = vsub.s32 0, %v1768
    %v1770 = vrot.slane %v117, %v1769
    %v1771 = vlaneseq
    %v1772 = vshrl.u32 %v1771, 7
    %v1773 = vsub.s32 1, %v1772
    %v1774 = vrot.slane %v117, %v1773
    %v1841 = vunpack.c.l.b16 %v1702
    %v1842 = vunpack.c.h.b16 %v1702
    %v1843 = vunpack.c.l.b16 %v1703
    %v1844 = vunpack.c.h.b16 %v1703
    %v1845 = vunpack.c.l.b16 %v1704
    %v1846 = vunpack.c.h.b16 %v1704
    %v1847 = vunpack.c.l.b16 %v1705
    %v1848 = vunpack.c.h.b16 %v1705
    %v1849 = vunpack.c.l.b16 %v1706
    %v1850 = vunpack.c.h.b16 %v1706
    %v1851 = vunpack.c.l.b16 %v1707
    %v1852 = vunpack.c.h.b16 %v1707
    %v1853 = vunpack.c.l.b16 %v1708
    %v1854 = vunpack.c.h.b16 %v1708
    %v1855 = vunpack.c.l.b16 %v1709
    %v1856 = vunpack.c.h.b16 %v1709
    %v1857 = vunpack.c.l.b16 %v1710
    %v1858 = vunpack.c.h.b16 %v1710
    %v1859 = vunpack.c.l.b16 %v1711
    %v1860 = vunpack.c.h.b16 %v1711
    %v1861 = vunpack.c.l.b16 %v1712
    %v1862 = vunpack.c.h.b16 %v1712
    %v1863 = vunpack.c.l.b16 %v1713
    %v1864 = vunpack.c.h.b16 %v1713
    %v1865 = vunpack.c.l.b16 %v1714
    %v1866 = vunpack.c.h.b16 %v1714
    %v1867 = vunpack.c.l.b16 %v1715
    %v1868 = vunpack.c.h.b16 %v1715
    %v1869 = vunpack.c.l.b16 %v1716
    %v1870 = vunpack.c.h.b16 %v1716
    %v1871 = vunpack.c.l.b16 %v1717
    %v1872 = vunpack.c.h.b16 %v1717
    %v1873 = vunpack.c.l.b16 %v1718
    %v1874 = vunpack.c.h.b16 %v1718
    %v1875 = vunpack.c.l.b16 %v1719
    %v1876 = vunpack.c.h.b16 %v1719
    %v1877 = vunpack.c.l.b16 %v1720
    %v1878 = vunpack.c.h.b16 %v1720
    %v1879 = vunpack.c.l.b16 %v1721
    %v1880 = vunpack.c.h.b16 %v1721
    %v1881 = vunpack.c.l.b16 %v1722
    %v1882 = vunpack.c.h.b16 %v1722
    %v1883 = vunpack.c.l.b16 %v1723
    %v1884 = vunpack.c.h.b16 %v1723
    %v1885 = vunpack.c.l.b16 %v1724
    %v1886 = vunpack.c.h.b16 %v1724
    %v1887 = vunpack.c.l.b16 %v1725
    %v1888 = vunpack.c.h.b16 %v1725
    %v1889 = vunpack.c.l.b16 %v1726
    %v1890 = vunpack.c.h.b16 %v1726
    %v1891 = vunpack.c.l.b16 %v1727
    %v1892 = vunpack.c.h.b16 %v1727
    %v1893 = vunpack.c.l.b16 %v1728
    %v1894 = vunpack.c.h.b16 %v1728
    %v1895 = vunpack.c.l.b16 %v1729
    %v1896 = vunpack.c.h.b16 %v1729
    %v1897 = vunpack.c.l.b16 %v1730
    %v1898 = vunpack.c.h.b16 %v1730
    %v1899 = vunpack.c.l.b16 %v1731
    %v1900 = vunpack.c.h.b16 %v1731
    %v1901 = vunpack.c.l.b16 %v1732
    %v1902 = vunpack.c.h.b16 %v1732
    %v1903 = vunpack.c.l.b16 %v1733
    %v1904 = vunpack.c.h.b16 %v1733
    %v1905 = vunpack.c.l.b16 %v1734
    %v1906 = vunpack.c.h.b16 %v1734
    %v1907 = vunpack.c.l.b16 %v1735
    %v1908 = vunpack.c.h.b16 %v1735
    %v1909 = vunpack.c.l.b16 %v1736
    %v1910 = vunpack.c.h.b16 %v1736
    %v1911 = vunpack.c.l.b16 %v1737
    %v1912 = vunpack.c.h.b16 %v1737
    %v1913 = vunpack.c.l.b16 %v1738
    %v1914 = vunpack.c.h.b16 %v1738
    %v1915 = vunpack.c.l.b16 %v1739
    %v1916 = vunpack.c.h.b16 %v1739
    %v1917 = vunpack.c.l.b16 %v1740
    %v1918 = vunpack.c.h.b16 %v1740
    %v1919 = vunpack.c.l.b16 %v1741
    %v1920 = vunpack.c.h.b16 %v1741
    %v1921 = vunpack.c.l.b16 %v1742
    %v1922 = vunpack.c.h.b16 %v1742
    %v1923 = vunpack.c.l.b16 %v1743
    %v1924 = vunpack.c.h.b16 %v1743
    %v1925 = vunpack.c.l.b16 %v1744
    %v1926 = vunpack.c.h.b16 %v1744
    %v1927 = vunpack.c.l.b16 %v1745
    %v1928 = vunpack.c.h.b16 %v1745
    %v1929 = vunpack.c.l.b16 %v1746
    %v1930 = vunpack.c.h.b16 %v1746
    %v1931 = vunpack.c.l.b16 %v1747
    %v1932 = vunpack.c.h.b16 %v1747
    %v1933 = vunpack.c.l.b16 %v1748
    %v1934 = vunpack.c.h.b16 %v1748
    %v1935 = vunpack.c.l.b16 %v1749
    %v1936 = vunpack.c.h.b16 %v1749
    %v1937 = vunpack.c.l.b16 %v1750
    %v1938 = vunpack.c.h.b16 %v1750
    %v1939 = vunpack.c.l.b16 %v1751
    %v1940 = vunpack.c.h.b16 %v1751
    %v1941 = vunpack.c.l.b16 %v1752
    %v1942 = vunpack.c.h.b16 %v1752
    %v1943 = vunpack.c.l.b16 %v1753
    %v1944 = vunpack.c.h.b16 %v1753
    %v1945 = vunpack.c.l.b16 %v1754
    %v1946 = vunpack.c.h.b16 %v1754
    %v1947 = vunpack.c.l.b16 %v1755
    %v1948 = vunpack.c.h.b16 %v1755
    %v1949 = vunpack.c.l.b16 %v1756
    %v1950 = vunpack.c.h.b16 %v1756
    %v1951 = vunpack.c.l.b16 %v1757
    %v1952 = vunpack.c.h.b16 %v1757
    %v1953 = vunpack.c.l.b16 %v1758
    %v1954 = vunpack.c.h.b16 %v1758
    %v1955 = vunpack.c.l.b16 %v1759
    %v1956 = vunpack.c.h.b16 %v1759
    %v1957 = vunpack.c.l.b16 %v1760
    %v1958 = vunpack.c.h.b16 %v1760
    %v1959 = vunpack.c.l.b16 %v1761
    %v1960 = vunpack.c.h.b16 %v1761
    %v1961 = vunpack.c.l.b16 %v1762
    %v1962 = vunpack.c.h.b16 %v1762
    %v1963 = vunpack.c.l.b16 %v1763
    %v1964 = vunpack.c.h.b16 %v1763
    %v1965 = vunpack.c.l.b16 %v1764
    %v1966 = vunpack.c.h.b16 %v1764
    %v1967 = vunpack.c.l.b16 %v1765
    %v1968 = vunpack.c.h.b16 %v1765
    %v1969 = vpack.c.b16 %v1843, %v1841
    %v1970 = vpack.c.b16 %v1844, %v1842
    %v1971 = vpack.c.b16 %v1847, %v1845
    %v1972 = vpack.c.b16 %v1848, %v1846
    %v1973 = vpack.c.b16 %v1851, %v1849
    %v1974 = vpack.c.b16 %v1852, %v1850
    %v1975 = vpack.c.b16 %v1855, %v1853
    %v1976 = vpack.c.b16 %v1856, %v1854
    %v1977 = vpack.c.b16 %v1859, %v1857
    %v1978 = vpack.c.b16 %v1860, %v1858
    %v1979 = vpack.c.b16 %v1863, %v1861
    %v1980 = vpack.c.b16 %v1864, %v1862
    %v1981 = vpack.c.b16 %v1867, %v1865
    %v1982 = vpack.c.b16 %v1868, %v1866
    %v1983 = vpack.c.b16 %v1871, %v1869
    %v1984 = vpack.c.b16 %v1872, %v1870
    %v1985 = vpack.c.b16 %v1875, %v1873
    %v1986 = vpack.c.b16 %v1876, %v1874
    %v1987 = vpack.c.b16 %v1879, %v1877
    %v1988 = vpack.c.b16 %v1880, %v1878
    %v1989 = vpack.c.b16 %v1883, %v1881
    %v1990 = vpack.c.b16 %v1884, %v1882
    %v1991 = vpack.c.b16 %v1887, %v1885
    %v1992 = vpack.c.b16 %v1888, %v1886
    %v1993 = vpack.c.b16 %v1891, %v1889
    %v1994 = vpack.c.b16 %v1892, %v1890
    %v1995 = vpack.c.b16 %v1895, %v1893
    %v1996 = vpack.c.b16 %v1896, %v1894
    %v1997 = vpack.c.b16 %v1899, %v1897
    %v1998 = vpack.c.b16 %v1900, %v1898
    %v1999 = vpack.c.b16 %v1903, %v1901
    %v2000 = vpack.c.b16 %v1904, %v1902
    %v2001 = vpack.c.b16 %v1907, %v1905
    %v2002 = vpack.c.b16 %v1908, %v1906
    %v2003 = vpack.c.b16 %v1911, %v1909
    %v2004 = vpack.c.b16 %v1912, %v1910
    %v2005 = vpack.c.b16 %v1915, %v1913
    %v2006 = vpack.c.b16 %v1916, %v1914
    %v2007 = vpack.c.b16 %v1919, %v1917
    %v2008 = vpack.c.b16 %v1920, %v1918
    %v2009 = vpack.c.b16 %v1923, %v1921
    %v2010 = vpack.c.b16 %v1924, %v1922
    %v2011 = vpack.c.b16 %v1927, %v1925
    %v2012 = vpack.c.b16 %v1928, %v1926
    %v2013 = vpack.c.b16 %v1931, %v1929
    %v2014 = vpack.c.b16 %v1932, %v1930
    %v2015 = vpack.c.b16 %v1935, %v1933
    %v2016 = vpack.c.b16 %v1936, %v1934
    %v2017 = vpack.c.b16 %v1939, %v1937
    %v2018 = vpack.c.b16 %v1940, %v1938
    %v2019 = vpack.c.b16 %v1943, %v1941
    %v2020 = vpack.c.b16 %v1944, %v1942
    %v2021 = vpack.c.b16 %v1947, %v1945
    %v2022 = vpack.c.b16 %v1948, %v1946
    %v2023 = vpack.c.b16 %v1951, %v1949
    %v2024 = vpack.c.b16 %v1952, %v1950
    %v2025 = vpack.c.b16 %v1955, %v1953
    %v2026 = vpack.c.b16 %v1956, %v1954
    %v2027 = vpack.c.b16 %v1959, %v1957
    %v2028 = vpack.c.b16 %v1960, %v1958
    %v2029 = vpack.c.b16 %v1963, %v1961
    %v2030 = vpack.c.b16 %v1964, %v1962
    %v2031 = vpack.c.b16 %v1967, %v1965
    %v2032 = vpack.c.b16 %v1968, %v1966
    %2097 = vmatprep.subr.bf16.mxu0 %v1970
    %2098 = vmatpush1.bf16.msra.mxu0 %v1969
    %2099 = vmatprep.subr.bf16.mxu0 %v1972
    %2100 = vmatpush1.bf16.msra.mxu0 %v1971
    %2101 = vmatprep.subr.bf16.mxu0 %v1974
    %2102 = vmatpush1.bf16.msra.mxu0 %v1973
    %2103 = vmatprep.subr.bf16.mxu0 %v1976
    %2104 = vmatpush1.bf16.msra.mxu0 %v1975
    %2105 = vmatprep.subr.bf16.mxu0 %v1978
    %2106 = vmatpush1.bf16.msra.mxu0 %v1977
    %2107 = vmatprep.subr.bf16.mxu0 %v1980
    %2108 = vmatpush1.bf16.msra.mxu0 %v1979
    %2109 = vmatprep.subr.bf16.mxu0 %v1982
    %2110 = vmatpush1.bf16.msra.mxu0 %v1981
    %2111 = vmatprep.subr.bf16.mxu0 %v1984
    %2112 = vmatpush1.bf16.msra.mxu0 %v1983
    %2113 = vmatprep.subr.bf16.mxu0 %v1986
    %2114 = vmatpush1.bf16.msra.mxu0 %v1985
    %2115 = vmatprep.subr.bf16.mxu0 %v1988
    %2116 = vmatpush1.bf16.msra.mxu0 %v1987
    %2117 = vmatprep.subr.bf16.mxu0 %v1990
    %2118 = vmatpush1.bf16.msra.mxu0 %v1989
    %2119 = vmatprep.subr.bf16.mxu0 %v1992
    %2120 = vmatpush1.bf16.msra.mxu0 %v1991
    %2121 = vmatprep.subr.bf16.mxu0 %v1994
    %2122 = vmatpush1.bf16.msra.mxu0 %v1993
    %2123 = vmatprep.subr.bf16.mxu0 %v1996
    %2124 = vmatpush1.bf16.msra.mxu0 %v1995
    %2125 = vmatprep.subr.bf16.mxu0 %v1998
    %2126 = vmatpush1.bf16.msra.mxu0 %v1997
    %2127 = vmatprep.subr.bf16.mxu0 %v2000
    %2128 = vmatpush1.bf16.msra.mxu0 %v1999
    %2129 = vmatprep.mubr.bf16.mxu0 %v1699
    %2130 = vmatmul.mubr.bf16.gmra.mrb[0].mxu0 %v1698
    %v2131 = vpop.f32.mrb[0].mxu0
    %v2132 = vadd.f32 %v1770, %v2131
    %v2133 = vpop.f32.mrb[0].mxu0
    %v2134 = vadd.f32 %v1774, %v2133
    %v2135 = vpop.f32.mrb[0].mxu0
    %v2136 = vpop.f32.mrb[0].mxu0
    %2137 = vdwg.mxu0
    %2138 = vmatprep.subr.bf16.mxu0 %v2002
    %2139 = vmatpush1.bf16.msra.mxu0 %v2001
    %2140 = vmatprep.subr.bf16.mxu0 %v2004
    %2141 = vmatpush1.bf16.msra.mxu0 %v2003
    %2142 = vmatprep.subr.bf16.mxu0 %v2006
    %2143 = vmatpush1.bf16.msra.mxu0 %v2005
    %2144 = vmatprep.subr.bf16.mxu0 %v2008
    %2145 = vmatpush1.bf16.msra.mxu0 %v2007
    %2146 = vmatprep.subr.bf16.mxu0 %v2010
    %2147 = vmatpush1.bf16.msra.mxu0 %v2009
    %2148 = vmatprep.subr.bf16.mxu0 %v2012
    %2149 = vmatpush1.bf16.msra.mxu0 %v2011
    %2150 = vmatprep.subr.bf16.mxu0 %v2014
    %2151 = vmatpush1.bf16.msra.mxu0 %v2013
    %2152 = vmatprep.subr.bf16.mxu0 %v2016
    %2153 = vmatpush1.bf16.msra.mxu0 %v2015
    %2154 = vmatprep.subr.bf16.mxu0 %v2018
    %2155 = vmatpush1.bf16.msra.mxu0 %v2017
    %2156 = vmatprep.subr.bf16.mxu0 %v2020
    %2157 = vmatpush1.bf16.msra.mxu0 %v2019
    %2158 = vmatprep.subr.bf16.mxu0 %v2022
    %2159 = vmatpush1.bf16.msra.mxu0 %v2021
    %2160 = vmatprep.subr.bf16.mxu0 %v2024
    %2161 = vmatpush1.bf16.msra.mxu0 %v2023
    %2162 = vmatprep.subr.bf16.mxu0 %v2026
    %2163 = vmatpush1.bf16.msra.mxu0 %v2025
    %2164 = vmatprep.subr.bf16.mxu0 %v2028
    %2165 = vmatpush1.bf16.msra.mxu0 %v2027
    %2166 = vmatprep.subr.bf16.mxu0 %v2030
    %2167 = vmatpush1.bf16.msra.mxu0 %v2029
    %2168 = vmatprep.subr.bf16.mxu0 %v2032
    %2169 = vmatpush1.bf16.msra.mxu0 %v2031
    %2170 = vmatprep.mubr.bf16.mxu0 %v1701
    %2171 = vmatmul.mubr.bf16.gmra.mrb[0].mxu0 %v1700
    %v2172 = vpop.f32.mrb[0].mxu0
    %v2173 = vadd.f32 %v2132, %v2172
    %v2174 = vpop.f32.mrb[0].mxu0
    %v2175 = vadd.f32 %v2134, %v2174
    %v2176 = vpop.f32.mrb[0].mxu0
    %v2177 = vpop.f32.mrb[0].mxu0
    %2178 = vdwg.mxu0
    %v2179 = vadd.f32 %v2173, %v2175
    %2180 = vadd.xlane.f32.xlu0 %v2179
    %v2181 = vpop.xlane.xlu0 %2180
    %v2182 = vmul.f32 %v2173, %v2173
    %v2183 = vmul.f32 %v2175, %v2175
    %v2184 = vadd.f32 %v2182, %v2183
    %2185 = vadd.xlane.f32.xlu0 %v2184
    %v2186 = vpop.xlane.xlu0 %2185
    %v2187 = vmul.f32 %v2181, 0.00390625
    %v2188 = vmul.f32 %v2186, 0.00390625
    %v2189 = vmul.f32 %v2187, %v2187
    %v2190 = vsub.f32 %v2188, %v2189
    %v2191 = vmax.f32 %v2190, 0.0
    %v2192 = vsub.f32 %v2173, %v2187
    %v2193 = vsub.f32 %v2175, %v2187
    %v2194 = vadd.f32 %v2191, 1e-05
    %v2195 = vrsqrt.pop %v2194
    %v2196 = vmul.f32 %v2192, %v2195
    %v2197 = vmul.f32 %v2193, %v2195
    %v2199 = vlaneseq
    %v2200 = vshrl.u32 %v2199, 7
    %v2201 = vsub.s32 0, %v2200
    %v2202 = vrot.slane %v119, %v2201
    %v2203 = vlaneseq
    %v2204 = vshrl.u32 %v2203, 7
    %v2205 = vsub.s32 1, %v2204
    %v2206 = vrot.slane %v119, %v2205
    %v2209 = vmul.f32 %v2196, %v2202
    %v2210 = vmul.f32 %v2197, %v2206
    %v2212 = vlaneseq
    %v2213 = vshrl.u32 %v2212, 7
    %v2214 = vsub.s32 0, %v2213
    %v2215 = vrot.slane %v121, %v2214
    %v2216 = vlaneseq
    %v2217 = vshrl.u32 %v2216, 7
    %v2218 = vsub.s32 1, %v2217
    %v2219 = vrot.slane %v121, %v2218
    %v2222 = vadd.f32 %v2209, %v2215
    %v2223 = vadd.f32 %v2210, %v2219
    %v2224 = vmax.f32 %v2222, 0.0
    %v2225 = vmax.f32 %v2223, 0.0
    %2226 = vst [vmem:[#allocation13] sm:$0xff] %v2224
    %2227 = vst [vmem:[#allocation13 + $0x8] sm:$0xff] %v2225
    // Predicated region
    $region50: #{tpu_custom_call.1} parent=1 // pred_check
      _
    $region51: #{tpu_custom_call.1} parent=1 // pred_check_branch
      %2229 = sbr.rel (0) target = $region53
    $region52: #{tpu_custom_call.1} parent=1 // pred_region
      %s2231 = ssub.s32 256, 256
      %2232 = vsyncadd [#allocation4], %s2231
      %s2234 = sshll.u32 [#allocation13], 4
      %s2235 = int_to_ptr.vmem [resolvable:$true] %s2234
      %2237 = dma.vmem_to_hbm [thread:$0]  %s2235, 256, %s6, [#allocation4]
    $region53: #{tpu_custom_call.1} parent=1 // pred_fallthru
      _
    // Predicated region
    $region54: #{tpu_custom_call.1} parent=1 // pred_check
      _
    $region55: #{tpu_custom_call.1} parent=1 // pred_check_branch
      %2239 = sbr.rel (0) target = $region57
    $region56: #{tpu_custom_call.1} parent=1 // pred_region
      %2240 = dma.done [#allocation4], 256
    $region57: #{tpu_custom_call.1} parent=1 // pred_fallthru
      _
    %2241 = vsyncpa [#allocation3], 1
    %2242 = vsyncpa [#allocation6], 1
    %2243 = vsyncpa [#allocation9], 1
    %2244 = vsyncpa [#allocation12], 1
    %2245 = vsyncpa [#allocation4], 1

</llo_original>
